<compile_context>
chip_gen: v5e
topology: v5e:2x2
jax: 0.10.0
libtpu: 0.0.40
codegen_flags: <defaults>
</compile_context>

<pallas_src>
import functools

import numpy as np
import jax
import jax.numpy as jnp
from jax import lax
from jax.experimental import pallas as pl
from jax.experimental.pallas import tpu as pltpu

MAX_BINS = 256
_F32_BIG = 3.0e38


def _otsu_kernel(mm_ref, x_ref, thr_ref, bad_ref, hist_ref, *,
                 n_valid, tile_np, max_bins, needs_mask):
    j = pl.program_id(1)
    last_j = pl.num_programs(1) - 1

    @pl.when(j == 0)
    def _():
        hist_ref[...] = jnp.zeros_like(hist_ref)

    mm = mm_ref[0]                                   # (1, 128) f32
    min_x = mm[:, 0:1]                               # (1, 1)
    max_x = mm[:, 1:2]                               # (1, 1)
    span = max_x - min_x
    bad = span == 0.0                                # (1, 1) bool
    safe_span = jnp.where(bad, jnp.float32(1.0), span)
    nbins_f = jnp.clip(jnp.floor(span + 1.0), 1.0, float(max_bins))   # (1, 1)

    # ---- hot loop: histogram of this pixel chunk (one == pass) -----------
    x = x_ref[0]                                     # (1, tile_np) f32
    bi = jnp.floor((x - min_x) * nbins_f / safe_span)
    bi = jnp.clip(bi, 0.0, nbins_f - 1.0)            # integer-valued f32
    if needs_mask:
        lane = lax.broadcasted_iota(jnp.int32, (1, tile_np), 1)
        pos = lane + j * tile_np
        # pad pixels -> out-of-range bin id, so they match no histogram bin
        bi = jnp.where(pos < n_valid, bi, jnp.float32(max_bins))

    b_col = lax.broadcasted_iota(jnp.int32, (max_bins, 1), 0).astype(jnp.float32)
    onehot = (bi == b_col).astype(jnp.float32)       # (B, tile_np)
    hist_ref[...] += jnp.sum(onehot, axis=1, keepdims=True)          # (B, 1)

    # ---- epilogue (last chunk): Otsu over the 256-bin histogram ----------
    @pl.when(j == last_j)
    def _():
        hist = hist_ref[...]                                          # (B, 1)
        bidx_col = lax.broadcasted_iota(jnp.int32, (max_bins, 1), 0
                                        ).astype(jnp.float32)
        t_row = lax.broadcasted_iota(jnp.int32, (1, max_bins), 1
                                     ).astype(jnp.float32)
        le = bidx_col <= t_row                                        # (B, B)
        # lane-dense prefix sums over bins: w1[t] = sum_{b<=t} hist[b]
        w1 = jnp.sum(jnp.where(le, hist, 0.0),
                     axis=0, keepdims=True)                           # (1, B)
        s1 = jnp.sum(jnp.where(le, hist * bidx_col, 0.0),
                     axis=0, keepdims=True)                           # (1, B)

        total_w = jnp.float32(n_valid)
        s_tot = s1[:, max_bins - 1:max_bins]                          # (1, 1)
        w2s = total_w - w1                                            # weight2[t+1]
        # means are in bin-offset units; the +min_x shift cancels in the diff
        m1 = s1 / jnp.maximum(w1, 1.0)
        m2 = (s_tot - s1) / jnp.maximum(w2s, 1.0)
        var12 = (w1 * w2s) * (m1 - m2) ** 2                           # (1, B)

        nbins_i = nbins_f.astype(jnp.int32)                           # (1, 1)
        tt = lax.broadcasted_iota(jnp.int32, (1, max_bins), 1)
        valid_t = tt < (nbins_i - 1)            # variance12 has nbins-1 entries
        big = jnp.float32(_F32_BIG)
        score = jnp.where(valid_t, var12, -big)
        best = jnp.max(score)
        idx = jnp.min(jnp.where(score == best, tt, jnp.int32(max_bins)))

        thr = jnp.where(bad, min_x, min_x + idx.astype(jnp.float32))  # (1, 1)
        thr_ref[0] = jnp.broadcast_to(thr, (1, 128))
        bad_ref[0] = jnp.broadcast_to(bad.astype(jnp.int32), (1, 128))


def st_otsu(x, *, tile_np=2048, max_bins=MAX_BINS):
    """Otsu threshold per image.

    x: (b, ...) batch of integer-valued float images (or a single image).
    Returns (threshold float32 (b,), bad_egg bool (b,)); scalars if unbatched.
    """
    x = jnp.asarray(x, jnp.float32)
    single = x.ndim <= 2
    if single:
        x = x[None]
    b = x.shape[0]
    n = 1
    for d in x.shape[1:]:
        n *= int(d)
    flat = x.reshape(b, n)

    # Per-image min/max hoisted out of the kernel (cheap XLA reductions) so the
    # kernel can stream fixed-size pixel chunks with pipelined DMA.
    minv = jnp.min(flat, axis=1)
    maxv = jnp.max(flat, axis=1)
    mm = jnp.zeros((b, 1, 128), jnp.float32)
    mm = mm.at[:, 0, 0].set(minv).at[:, 0, 1].set(maxv)

    tile = int(min(int(tile_np), max(128, ((n + 127) // 128) * 128)))
    tile = ((tile + 127) // 128) * 128               # lane-dense chunk width
    nchunks = -(-n // tile)
    npad = nchunks * tile
    needs_mask = npad != n
    xf = flat.reshape(b, 1, n)
    if needs_mask:
        xf = jnp.pad(xf, ((0, 0), (0, 0), (0, npad - n)))

    kern = functools.partial(_otsu_kernel, n_valid=n, tile_np=tile,
                             max_bins=int(max_bins), needs_mask=needs_mask)
    thr, bad = pl.pallas_call(
        kern,
        out_shape=(jax.ShapeDtypeStruct((b, 1, 128), jnp.float32),
                   jax.ShapeDtypeStruct((b, 1, 128), jnp.int32)),
        grid=(b, nchunks),
        in_specs=[pl.BlockSpec((1, 1, 128), lambda i, j: (i, 0, 0)),
                  pl.BlockSpec((1, 1, tile), lambda i, j: (i, 0, j))],
        out_specs=(pl.BlockSpec((1, 1, 128), lambda i, j: (i, 0, 0)),
                   pl.BlockSpec((1, 1, 128), lambda i, j: (i, 0, 0))),
        scratch_shapes=[pltpu.VMEM((int(max_bins), 1), jnp.float32)],
        compiler_params=pltpu.CompilerParams(
            dimension_semantics=("parallel", "arbitrary"),
            vmem_limit_bytes=32 * 1024 * 1024),
    )(mm, xf)
    thr = thr[:, 0, 0]
    bad = bad[:, 0, 0].astype(bool)
    if single:
        return thr[0], bad[0]
    return thr, bad


def _otsu_reference(img):
    """Pure numpy transcription of the PyTorch _STOtsu forward (float32)."""
    img = np.asarray(img, dtype=np.float32)
    mn = float(img.min())
    mx = float(img.max())
    if mn == mx:
        return mn, True, None
    bins = int(mx - mn + 1)
    centers = (mn + np.arange(bins, dtype=np.float32)).astype(np.float32)
    span = np.float32(mx - mn)
    bi = np.floor((img - np.float32(mn)) * np.float32(bins) / span)
    bi = np.clip(bi, 0, bins - 1).astype(np.int64)
    hist = np.bincount(bi.ravel(), minlength=bins).astype(np.float32)
    w1 = np.cumsum(hist, dtype=np.float32)
    w2 = np.cumsum(hist[::-1], dtype=np.float32)[::-1]
    wc = hist * centers
    m1 = np.cumsum(wc, dtype=np.float32) / w1
    m2 = (np.cumsum(wc[::-1], dtype=np.float32)
          / np.cumsum(hist[::-1], dtype=np.float32))[::-1]
    var12 = (w1[:-1] * w2[1:]) * (m1[:-1] - m2[1:]) ** 2
    idx = int(np.argmax(var12))
    return float(centers[:-1][idx]), False, var12


def _check(thr_k, bad_k, img):
    t_exp, bad_exp, var12 = _otsu_reference(img)
    assert bool(bad_k) == bad_exp, (bool(bad_k), bad_exp)
    if bad_exp:
        assert abs(float(thr_k) - t_exp) < 1e-3, (float(thr_k), t_exp)
        return
    if abs(float(thr_k) - t_exp) < 1e-3:
        return
    # accept any threshold whose inter-class variance ties the optimum
    mn = float(np.asarray(img, np.float32).min())
    k_idx = int(round(float(thr_k) - mn))
    assert 0 <= k_idx < var12.shape[0], (float(thr_k), t_exp)
    assert var12[k_idx] >= var12.max() * (1.0 - 1e-5), (float(thr_k), t_exp)


if __name__ == "__main__":
    key = jax.random.PRNGKey(0)
    k0, k1, k2 = jax.random.split(key, 3)

    # batch of two 16x16 images, one degenerate (bad_egg path)
    img0 = jax.random.randint(k0, (16, 16), 0, 50).astype(jnp.float32)
    img1 = jnp.full((16, 16), 7.0, jnp.float32)
    x = jnp.stack([img0, img1], axis=0)               # (2, 16, 16)
    thr, bad = st_otsu(x)
    thr = jax.block_until_ready(thr)
    bad = jax.block_until_ready(bad)
    assert thr.shape == (2,) and bad.shape == (2,)
    x_np = np.asarray(x)
    for i in range(2):
        _check(thr[i], bad[i], x_np[i])

    # single unbatched image whose flattened size is not lane-aligned
    # (exercises the pad-pixel masking path)
    img2 = jax.random.randint(k1, (7, 9), 0, 30).astype(jnp.float32)
    t2, b2 = st_otsu(img2)
    t2 = jax.block_until_ready(t2)
    _check(t2, b2, np.asarray(img2))

    # larger image forced through multiple pixel chunks (exercises the
    # cross-chunk histogram accumulator)
    img3 = jax.random.randint(k2, (1, 32, 32), 0, 200).astype(jnp.float32)
    t3, b3 = st_otsu(img3, tile_np=256)
    t3 = jax.block_until_ready(t3)
    _check(t3[0], b3[0], np.asarray(img3)[0])

    print("KERNEL_OK")
</pallas_src>

<mosaic_0001>
module attributes {stable_mosaic.version = 11 : i64} {
  func.func @_otsu_kernel(%arg0: i32, %arg1: i32, %arg2: memref<1x1x128xf32, #tpu.memory_space<vmem>>, %arg3: memref<1x1x256xf32, #tpu.memory_space<vmem>>, %arg4: memref<1x1x128xf32, #tpu.memory_space<vmem>>, %arg5: memref<1x1x128xi32, #tpu.memory_space<vmem>>, %arg6: memref<256x1xf32, #tpu.memory_space<vmem>>) attributes {dimension_semantics = [#tpu.dimension_semantics<parallel>, #tpu.dimension_semantics<arbitrary>], iteration_bounds = array<i64: 2, 1>, scalar_prefetch = 0 : i64, scratch_operands = 1 : i64, tpu.core_type = #tpu.core_type<tc>, window_params = [{transform_indices = @transform_0, window_bounds = array<i64: 1, 1, 128>}, {transform_indices = @transform_1, window_bounds = array<i64: 1, 1, 256>}, {transform_indices = @transform_2, window_bounds = array<i64: 1, 1, 128>}, {transform_indices = @transform_3, window_bounds = array<i64: 1, 1, 128>}]} {
    %c0_i32 = arith.constant 0 : i32
    %0 = arith.cmpi eq, %arg1, %c0_i32 : i32
    %1 = arith.extui %0 : i1 to i32
    %c0_i32_0 = arith.constant 0 : i32
    %2 = arith.cmpi ne, %1, %c0_i32_0 : i32
    scf.if %2 {
      %cst_19 = arith.constant 0.000000e+00 : f32
      %49 = vector.broadcast %cst_19 : f32 to vector<256x1xf32>
      %c0_20 = arith.constant 0 : index
      %c0_21 = arith.constant 0 : index
      %50 = vector.load %arg6[%c0_20, %c0_21] : memref<256x1xf32, #tpu.memory_space<vmem>>, vector<256x1xf32>
      tpu.vector_store %arg6[%c0_20, %c0_21], %49 {strides = array<i32>} : memref<256x1xf32, #tpu.memory_space<vmem>>, vector<256x1xf32>,
    } else {
    }
    %c0 = arith.constant 0 : index
    %c0_1 = arith.constant 0 : index
    %c0_2 = arith.constant 0 : index
    %3 = vector.load %arg2[%c0, %c0_1, %c0_2] : memref<1x1x128xf32, #tpu.memory_space<vmem>>, vector<1x1x128xf32>
    %4 = vector.shape_cast %3 : vector<1x1x128xf32> to vector<1x128xf32>
    %5 = vector.extract_strided_slice %4 {offsets = [0, 0], sizes = [1, 1], strides = [1, 1]} : vector<1x128xf32> to vector<1x1xf32>
    %6 = vector.extract_strided_slice %4 {offsets = [0, 1], sizes = [1, 1], strides = [1, 1]} : vector<1x128xf32> to vector<1x1xf32>
    %7 = arith.subf %6, %5 : vector<1x1xf32>
    %cst = arith.constant 0.000000e+00 : f32
    %8 = vector.broadcast %cst : f32 to vector<1x1xf32>
    %9 = arith.cmpf oeq, %7, %8 : vector<1x1xf32>
    %cst_3 = arith.constant 1.000000e+00 : f32
    %10 = vector.broadcast %cst_3 : f32 to vector<1x1xf32>
    %11 = arith.select %9, %10, %7 : vector<1x1xi1>, vector<1x1xf32>
    %cst_4 = arith.constant 1.000000e+00 : f32
    %12 = vector.broadcast %cst_4 : f32 to vector<1x1xf32>
    %13 = arith.addf %7, %12 : vector<1x1xf32>
    %14 = math.floor %13 : vector<1x1xf32>
    %cst_5 = arith.constant 1.000000e+00 : f32
    %cst_6 = arith.constant 2.560000e+02 : f32
    %15 = vector.broadcast %cst_5 : f32 to vector<1x1xf32>
    %16 = arith.maximumf %15, %14 : vector<1x1xf32>
    %17 = vector.broadcast %cst_6 : f32 to vector<1x1xf32>
    %18 = arith.minimumf %17, %16 : vector<1x1xf32>
    %c0_7 = arith.constant 0 : index
    %c0_8 = arith.constant 0 : index
    %c0_9 = arith.constant 0 : index
    %19 = vector.load %arg3[%c0_7, %c0_8, %c0_9] : memref<1x1x256xf32, #tpu.memory_space<vmem>>, vector<1x1x256xf32>
    %20 = vector.shape_cast %19 : vector<1x1x256xf32> to vector<1x256xf32>
    %21 = vector.broadcast %5 : vector<1x1xf32> to vector<1x256xf32>
    %22 = arith.subf %20, %21 : vector<1x256xf32>
    %23 = vector.broadcast %18 : vector<1x1xf32> to vector<1x256xf32>
    %24 = arith.mulf %22, %23 : vector<1x256xf32>
    %25 = vector.broadcast %11 : vector<1x1xf32> to vector<1x256xf32>
    %26 = arith.divf %24, %25 : vector<1x256xf32>
    %27 = math.floor %26 : vector<1x256xf32>
    %cst_10 = arith.constant 1.000000e+00 : f32
    %28 = vector.broadcast %cst_10 : f32 to vector<1x1xf32>
    %29 = arith.subf %18, %28 : vector<1x1xf32>
    %cst_11 = arith.constant 0.000000e+00 : f32
    %30 = vector.broadcast %cst_11 : f32 to vector<1x256xf32>
    %31 = arith.maximumf %30, %27 : vector<1x256xf32>
    %32 = vector.broadcast %29 : vector<1x1xf32> to vector<1x256xf32>
    %33 = arith.minimumf %32, %31 : vector<1x256xf32>
    %34 = tpu.iota {dimensions = array<i32: 0>} : vector<256x1xi32>
    %35 = arith.sitofp %34 : vector<256x1xi32> to vector<256x1xf32>
    %36 = vector.broadcast %33 : vector<1x256xf32> to vector<256x256xf32>
    %37 = vector.broadcast %35 : vector<256x1xf32> to vector<256x256xf32>
    %38 = arith.cmpf oeq, %36, %37 : vector<256x256xf32>
    %39 = arith.extui %38 : vector<256x256xi1> to vector<256x256xi32>
    %40 = arith.sitofp %39 : vector<256x256xi32> to vector<256x256xf32>
    %c0_12 = arith.constant 0 : index
    %c0_13 = arith.constant 0 : index
    %41 = vector.load %arg6[%c0_12, %c0_13] : memref<256x1xf32, #tpu.memory_space<vmem>>, vector<256x1xf32>
    %cst_14 = arith.constant dense<0.000000e+00> : vector<256xf32>
    %42 = vector.multi_reduction <add>, %40, %cst_14 [1] : vector<256x256xf32> to vector<256xf32>
    %43 = vector.shape_cast %42 : vector<256xf32> to vector<256x1xf32>
    %44 = arith.addf %41, %43 : vector<256x1xf32>
    %c0_15 = arith.constant 0 : index
    %c0_16 = arith.constant 0 : index
    %45 = vector.load %arg6[%c0_15, %c0_16] : memref<256x1xf32, #tpu.memory_space<vmem>>, vector<256x1xf32>
    tpu.vector_store %arg6[%c0_15, %c0_16], %44 {strides = array<i32>} : memref<256x1xf32, #tpu.memory_space<vmem>>, vector<256x1xf32>,
    %c0_i32_17 = arith.constant 0 : i32
    %46 = arith.cmpi eq, %arg1, %c0_i32_17 : i32
    %47 = arith.extui %46 : i1 to i32
    %c0_i32_18 = arith.constant 0 : i32
    %48 = arith.cmpi ne, %47, %c0_i32_18 : i32
    scf.if %48 {
      %c0_19 = arith.constant 0 : index
      %c0_20 = arith.constant 0 : index
      %49 = vector.load %arg6[%c0_19, %c0_20] : memref<256x1xf32, #tpu.memory_space<vmem>>, vector<256x1xf32>
      %50 = tpu.iota {dimensions = array<i32: 0>} : vector<256x1xi32>
      %51 = arith.sitofp %50 : vector<256x1xi32> to vector<256x1xf32>
      %52 = tpu.iota {dimensions = array<i32: 1>} : vector<1x256xi32>
      %53 = arith.sitofp %52 : vector<1x256xi32> to vector<1x256xf32>
      %54 = vector.broadcast %51 : vector<256x1xf32> to vector<256x256xf32>
      %55 = vector.broadcast %53 : vector<1x256xf32> to vector<256x256xf32>
      %56 = arith.cmpf ole, %54, %55 : vector<256x256xf32>
      %cst_21 = arith.constant 0.000000e+00 : f32
      %57 = vector.shape_cast %49 : vector<256x1xf32> to vector<256x1xf32>
      %58 = vector.broadcast %57 : vector<256x1xf32> to vector<256x256xf32>
      %59 = vector.broadcast %cst_21 : f32 to vector<256x256xf32>
      %60 = arith.select %56, %58, %59 : vector<256x256xi1>, vector<256x256xf32>
      %cst_22 = arith.constant dense<0.000000e+00> : vector<256xf32>
      %61 = vector.multi_reduction <add>, %60, %cst_22 [0] : vector<256x256xf32> to vector<256xf32>
      %62 = vector.shape_cast %61 : vector<256xf32> to vector<1x256xf32>
      %63 = arith.mulf %49, %51 : vector<256x1xf32>
      %cst_23 = arith.constant 0.000000e+00 : f32
      %64 = vector.shape_cast %63 : vector<256x1xf32> to vector<256x1xf32>
      %65 = vector.broadcast %64 : vector<256x1xf32> to vector<256x256xf32>
      %66 = vector.broadcast %cst_23 : f32 to vector<256x256xf32>
      %67 = arith.select %56, %65, %66 : vector<256x256xi1>, vector<256x256xf32>
      %cst_24 = arith.constant dense<0.000000e+00> : vector<256xf32>
      %68 = vector.multi_reduction <add>, %67, %cst_24 [0] : vector<256x256xf32> to vector<256xf32>
      %69 = vector.shape_cast %68 : vector<256xf32> to vector<1x256xf32>
      %70 = vector.extract_strided_slice %69 {offsets = [0, 255], sizes = [1, 1], strides = [1, 1]} : vector<1x256xf32> to vector<1x1xf32>
      %cst_25 = arith.constant 2.560000e+02 : f32
      %71 = vector.broadcast %cst_25 : f32 to vector<1x256xf32>
      %72 = arith.subf %71, %62 : vector<1x256xf32>
      %cst_26 = arith.constant 1.000000e+00 : f32
      %73 = vector.broadcast %cst_26 : f32 to vector<1x256xf32>
      %74 = arith.maximumf %62, %73 : vector<1x256xf32>
      %75 = arith.divf %69, %74 : vector<1x256xf32>
      %76 = vector.broadcast %70 : vector<1x1xf32> to vector<1x256xf32>
      %77 = arith.subf %76, %69 : vector<1x256xf32>
      %cst_27 = arith.constant 1.000000e+00 : f32
      %78 = vector.broadcast %cst_27 : f32 to vector<1x256xf32>
      %79 = arith.maximumf %72, %78 : vector<1x256xf32>
      %80 = arith.divf %77, %79 : vector<1x256xf32>
      %81 = arith.mulf %62, %72 : vector<1x256xf32>
      %82 = arith.subf %75, %80 : vector<1x256xf32>
      %83 = arith.mulf %82, %82 : vector<1x256xf32>
      %84 = arith.mulf %81, %83 : vector<1x256xf32>
      %85 = arith.fptosi %18 : vector<1x1xf32> to vector<1x1xi32>
      %86 = tpu.iota {dimensions = array<i32: 1>} : vector<1x256xi32>
      %c1_i32 = arith.constant 1 : i32
      %87 = vector.broadcast %c1_i32 : i32 to vector<1x1xi32>
      %88 = arith.subi %85, %87 : vector<1x1xi32>
      %89 = vector.broadcast %88 : vector<1x1xi32> to vector<1x256xi32>
      %90 = arith.cmpi slt, %86, %89 : vector<1x256xi32>
      %cst_28 = arith.constant 0.000000e+00 : f32
      %cst_29 = arith.constant 3.000000e+38 : f32
      %91 = arith.subf %cst_28, %cst_29 : f32
      %92 = vector.broadcast %91 : f32 to vector<1x256xf32>
      %93 = arith.select %90, %84, %92 : vector<1x256xi1>, vector<1x256xf32>
      %94 = vector.shape_cast %93 : vector<1x256xf32> to vector<1x1x256xf32>
      %cst_30 = arith.constant dense<0xFF800000> : vector<1xf32>
      %95 = vector.multi_reduction <maximumf>, %94, %cst_30 [1, 2] : vector<1x1x256xf32> to vector<1xf32>
      %96 = vector.shape_cast %95 : vector<1xf32> to vector<1x1x1xf32>
      %97 = vector.extract %96[0, 0, 0] : f32 from vector<1x1x1xf32>
      %98 = vector.broadcast %97 : f32 to vector<1x256xf32>
      %99 = arith.cmpf oeq, %93, %98 : vector<1x256xf32>
      %c256_i32 = arith.constant 256 : i32
      %100 = vector.broadcast %c256_i32 : i32 to vector<1x256xi32>
      %101 = arith.select %99, %86, %100 : vector<1x256xi1>, vector<1x256xi32>
      %102 = vector.shape_cast %101 : vector<1x256xi32> to vector<1x1x256xi32>
      %cst_31 = arith.constant dense<2147483647> : vector<1xi32>
      %103 = vector.multi_reduction <minsi>, %102, %cst_31 [1, 2] : vector<1x1x256xi32> to vector<1xi32>
      %104 = vector.shape_cast %103 : vector<1xi32> to vector<1x1x1xi32>
      %105 = vector.extract %104[0, 0, 0] : i32 from vector<1x1x1xi32>
      %106 = arith.sitofp %105 : i32 to f32
      %107 = vector.broadcast %106 : f32 to vector<1x1xf32>
      %108 = arith.addf %5, %107 : vector<1x1xf32>
      %109 = arith.select %9, %5, %108 : vector<1x1xi1>, vector<1x1xf32>
      %110 = vector.shape_cast %109 : vector<1x1xf32> to vector<1x1xf32>
      %111 = vector.broadcast %110 : vector<1x1xf32> to vector<1x128xf32>
      %c0_32 = arith.constant 0 : index
      %c0_33 = arith.constant 0 : index
      %c0_34 = arith.constant 0 : index
      %112 = vector.load %arg4[%c0_32, %c0_33, %c0_34] : memref<1x1x128xf32, #tpu.memory_space<vmem>>, vector<1x1x128xf32>
      %113 = vector.shape_cast %112 : vector<1x1x128xf32> to vector<1x128xf32>
      %114 = vector.shape_cast %111 : vector<1x128xf32> to vector<1x1x128xf32>
      tpu.vector_store %arg4[%c0_32, %c0_33, %c0_34], %114 {strides = array<i32>} : memref<1x1x128xf32, #tpu.memory_space<vmem>>, vector<1x1x128xf32>,
      %115 = arith.extui %9 : vector<1x1xi1> to vector<1x1xi32>
      %116 = vector.shape_cast %115 : vector<1x1xi32> to vector<1x1xi32>
      %117 = vector.broadcast %116 : vector<1x1xi32> to vector<1x128xi32>
      %c0_35 = arith.constant 0 : index
      %c0_36 = arith.constant 0 : index
      %c0_37 = arith.constant 0 : index
      %118 = vector.load %arg5[%c0_35, %c0_36, %c0_37] : memref<1x1x128xi32, #tpu.memory_space<vmem>>, vector<1x1x128xi32>
      %119 = vector.shape_cast %118 : vector<1x1x128xi32> to vector<1x128xi32>
      %120 = vector.shape_cast %117 : vector<1x128xi32> to vector<1x1x128xi32>
      tpu.vector_store %arg5[%c0_35, %c0_36, %c0_37], %120 {strides = array<i32>} : memref<1x1x128xi32, #tpu.memory_space<vmem>>, vector<1x1x128xi32>,
    } else {
    }
    return
  }
  func.func @transform_0(%arg0: i32, %arg1: i32) -> (i32, i32, i32) {
    %c0_i32 = arith.constant 0 : i32
    %c0_i32_0 = arith.constant 0 : i32
    %c0_i32_1 = arith.constant 0 : i32
    return %arg0, %c0_i32, %c0_i32_0 : i32, i32, i32
  }
  func.func @transform_1(%arg0: i32, %arg1: i32) -> (i32, i32, i32) {
    %c0_i32 = arith.constant 0 : i32
    %c0_i32_0 = arith.constant 0 : i32
    return %arg0, %c0_i32, %arg1 : i32, i32, i32
  }
  func.func @transform_2(%arg0: i32, %arg1: i32) -> (i32, i32, i32) {
    %c0_i32 = arith.constant 0 : i32
    %c0_i32_0 = arith.constant 0 : i32
    %c0_i32_1 = arith.constant 0 : i32
    return %arg0, %c0_i32, %c0_i32_0 : i32, i32, i32
  }
  func.func @transform_3(%arg0: i32, %arg1: i32) -> (i32, i32, i32) {
    %c0_i32 = arith.constant 0 : i32
    %c0_i32_0 = arith.constant 0 : i32
    %c0_i32_1 = arith.constant 0 : i32
    return %arg0, %c0_i32, %c0_i32_0 : i32, i32, i32
  }
}

</mosaic_0001>

<llo_original>
// kernel: tpu_custom_call.1
$region0: #{tpu_custom_call.1}
  #allocation0 [shape = 'u32[]', space=smem, size = 0x4, offset = 0x4, fixed_abs, tag = 'smem constant byte address 0x4 - core index']
  #allocation1 [shape = 'u32[72,128]{1,0:T(1,128)}', space=vmem, size = 0x9000, scoped, tag = 'internal scratch']
  #allocation2 [shape = 'f32[256,1]{1,0:T(8,128)}', space=vmem, size = 0x20000, scoped, tag = 'scratch operand']
  %s0 = inlined_call_operand.hbm [shape: f32[2,1,128], index: 0, kind: input, shape index: {}]
  %s1 = inlined_call_operand.hbm [shape: f32[2,1,256], index: 1, kind: input, shape index: {}]
  %s2 = inlined_call_operand.hbm [shape: f32[2,1,128], index: 2, kind: output, shape index: {0}]
  %s3 = inlined_call_operand.hbm [shape: s32[2,1,128], index: 3, kind: output, shape index: {1}]
  %4 = xla_tuple %s2, %s3
  %s5 = sld [smem:[#allocation0]]
  $region65: #{tpu_custom_call.1} parent=0
    _
  %s7 = ssub.s32 1, %s5
  %s8 = scalar_select 0, %s7, %s5
  $region1: #{tpu_custom_call.1} parent=0
    #allocation3 [shape = 'u8[1024]{0}', space=vmem, size = 0x400, scoped, tag = 'input window, operand 0']
    #allocation4 [shape = 's32[2]{0}', space=sflag, size = 0x8, scoped, tag = 'scoped memory for tpu_custom_call.1']
    #allocation5 [shape = 's32[2]{0}', space=sflag, size = 0x8, scoped, tag = 'scoped memory for tpu_custom_call.1']
    #allocation6 [shape = 'u8[2048]{0}', space=vmem, size = 0x800, scoped, tag = 'input window, operand 1']
    #allocation7 [shape = 's32[2]{0}', space=sflag, size = 0x8, scoped, tag = 'scoped memory for tpu_custom_call.1']
    #allocation8 [shape = 'u8[1024]{0}', space=vmem, size = 0x400, scoped, tag = 'output window, operand 0']
    #allocation9 [shape = 'u8[1024]{0}', space=vmem, size = 0x400, scoped, tag = 'output window, operand 1']
    #allocation10 [shape = 's32[2]{0}', space=sflag, size = 0x8, scoped, tag = 'scoped memory for tpu_custom_call.1']
    %9 = vsyncpa [#allocation4], 0
    %s10 = scalar_lea.sflag [#allocation4], 1
    %11 = vsyncpa %s10, 0
    %12 = vsyncpa [#allocation7], 0
    %s13 = scalar_lea.sflag [#allocation7], 1
    %14 = vsyncpa %s13, 0
    %15 = vsyncpa [#allocation5], 0
    %s16 = scalar_lea.sflag [#allocation5], 1
    %17 = vsyncpa %s16, 0
    %18 = vsyncpa [#allocation10], 0
    %s19 = scalar_lea.sflag [#allocation10], 1
    %20 = vsyncpa %s19, 0
    loop: start=0, step=1, limit=4
    $region2: #{tpu_custom_call.1} parent=1 // loop_pre_header
      _
    $region3: #{tpu_custom_call.1} parent=1 // loop_header
      %s22 = sphi 0, %s26
      %p23 = scmp.ge.s32.totalorder %s22, 4
      %s29 = sphi 0, %s41
      %s30 = sphi 0, %s37
      %s31 = sphi 0, %s29
      %s32 = sphi 0, %s30
      %s33 = sphi 0, %s31
      %s34 = sphi 0, %s32
      %s44 = sphi 0, %s46
      %s47 = sphi 0, %s44
      %s48 = sphi 0, %s47
      %s64 = sphi 0, %s48
      %s72 = sphi 0, %s74
      %s75 = sphi 0, %s72
      %s76 = sphi 0, %s75
      %s92 = sphi 0, %s76
      %s98 = sphi 0, %s100
      %s101 = sphi 0, %s98
      %s102 = sphi 0, %s101
      %s118 = sphi 0, %s102
      %s124 = sphi 0, %s126
      %s127 = sphi 0, %s124
      %s128 = sphi 0, %s127
      %s144 = sphi 0, %s128
    $region4: #{tpu_custom_call.1} parent=1 // loop_header_branch
      %25 = sbr.rel (%p23) target = $region8
    $region5: #{tpu_custom_call.1} parent=1 // loop_body
      %s27 = ssub.s32 %s22, 1
      %s28 = ssub.s32 %s22, 2
      %s35 = sadd.s32 1, %s30
      %p36 = scmp.ge.s32.totalorder %s35, 1
      %s37 = scalar_select %p36, 0, %s35
      %s38 = sadd.s32 1, %s29
      %s39 = scalar_select %p36, %s38, %s29
      %p40 = scmp.ge.s32.totalorder %s39, 2
      %s41 = scalar_select %p40, 0, %s39
      %s42 = ssub.s32 %s29, %s41
      %p43 = scmp.eq.s32.totalorder %s42, 0
      %s45 = sadd.s32 %s44, 1
      %s46 = scalar_select %p43, %s44, %s45
      %p49 = pneg %p43
      %p50 = scmp.eq.s32.totalorder %s22, 1
      %p51 = por %p49, %p50
      %p52 = scmp.ne.s32.totalorder %s44, %s47
      %p53 = scmp.eq.s32.totalorder %s22, 0
      %p54 = por %p52, %p53
      %p55 = scmp.ne.s32.totalorder %s44, %s47
      %p56 = scmp.eq.s32.totalorder %s27, 1
      %p57 = por %p55, %p56
      %p58 = scmp.ne.s32.totalorder %s47, %s48
      %p59 = scmp.eq.s32.totalorder %s27, 0
      %p60 = por %p58, %p59
      %p61 = scmp.ne.s32.totalorder %s47, %s48
      %p62 = scmp.eq.s32.totalorder %s28, 1
      %p63 = por %p61, %p62
      %p65 = scmp.ne.s32.totalorder %s48, %s64
      %p66 = scmp.eq.s32.totalorder %s28, 0
      %p67 = por %p65, %p66
      %s68 = ssub.s32 %s29, %s41
      %s69 = ssub.s32 %s30, %s37
      %s70 = sor.u32 %s68, %s69
      %p71 = scmp.eq.s32.totalorder %s70, 0
      %s73 = sadd.s32 %s72, 1
      %s74 = scalar_select %p71, %s72, %s73
      %p77 = pneg %p71
      %p78 = scmp.eq.s32.totalorder %s22, 1
      %p79 = por %p77, %p78
      %p80 = scmp.ne.s32.totalorder %s72, %s75
      %p81 = scmp.eq.s32.totalorder %s22, 0
      %p82 = por %p80, %p81
      %p83 = scmp.ne.s32.totalorder %s72, %s75
      %p84 = scmp.eq.s32.totalorder %s27, 1
      %p85 = por %p83, %p84
      %p86 = scmp.ne.s32.totalorder %s75, %s76
      %p87 = scmp.eq.s32.totalorder %s27, 0
      %p88 = por %p86, %p87
      %p89 = scmp.ne.s32.totalorder %s75, %s76
      %p90 = scmp.eq.s32.totalorder %s28, 1
      %p91 = por %p89, %p90
      %p93 = scmp.ne.s32.totalorder %s76, %s92
      %p94 = scmp.eq.s32.totalorder %s28, 0
      %p95 = por %p93, %p94
      %s96 = ssub.s32 %s29, %s41
      %p97 = scmp.eq.s32.totalorder %s96, 0
      %s99 = sadd.s32 %s98, 1
      %s100 = scalar_select %p97, %s98, %s99
      %p103 = pneg %p97
      %p104 = scmp.eq.s32.totalorder %s22, 1
      %p105 = por %p103, %p104
      %p106 = scmp.ne.s32.totalorder %s98, %s101
      %p107 = scmp.eq.s32.totalorder %s22, 0
      %p108 = por %p106, %p107
      %p109 = scmp.ne.s32.totalorder %s98, %s101
      %p110 = scmp.eq.s32.totalorder %s27, 1
      %p111 = por %p109, %p110
      %p112 = scmp.ne.s32.totalorder %s101, %s102
      %p113 = scmp.eq.s32.totalorder %s27, 0
      %p114 = por %p112, %p113
      %p115 = scmp.ne.s32.totalorder %s101, %s102
      %p116 = scmp.eq.s32.totalorder %s28, 1
      %p117 = por %p115, %p116
      %p119 = scmp.ne.s32.totalorder %s102, %s118
      %p120 = scmp.eq.s32.totalorder %s28, 0
      %p121 = por %p119, %p120
      %s122 = ssub.s32 %s29, %s41
      %p123 = scmp.eq.s32.totalorder %s122, 0
      %s125 = sadd.s32 %s124, 1
      %s126 = scalar_select %p123, %s124, %s125
      %p129 = pneg %p123
      %p130 = scmp.eq.s32.totalorder %s22, 1
      %p131 = por %p129, %p130
      %p132 = scmp.ne.s32.totalorder %s124, %s127
      %p133 = scmp.eq.s32.totalorder %s22, 0
      %p134 = por %p132, %p133
      %p135 = scmp.ne.s32.totalorder %s124, %s127
      %p136 = scmp.eq.s32.totalorder %s27, 1
      %p137 = por %p135, %p136
      %p138 = scmp.ne.s32.totalorder %s127, %s128
      %p139 = scmp.eq.s32.totalorder %s27, 0
      %p140 = por %p138, %p139
      %p141 = scmp.ne.s32.totalorder %s127, %s128
      %p142 = scmp.eq.s32.totalorder %s28, 1
      %p143 = por %p141, %p142
      %p145 = scmp.ne.s32.totalorder %s128, %s144
      %p146 = scmp.eq.s32.totalorder %s28, 0
      %p147 = por %p145, %p146
      %p148 = scmp.le.s32.totalorder 1, %s22
      %p149 = scmp.lt.s32.totalorder %s22, 3
      %p150 = pnand %p148, %p149
      %p151 = pneg %p150
      // Predicated region
      $region9: #{tpu_custom_call.1} parent=5 // pred_check
        _
      $region10: #{tpu_custom_call.1} parent=5 // pred_check_branch
        %153 = sbr.rel (%p150) target = $region12
      $region11: #{tpu_custom_call.1} parent=5 // pred_region
        %s154 = ssub.s32 %s22, 1
      $region12: #{tpu_custom_call.1} parent=5 // pred_fallthru
        _
      %p155 = scmp.lt.s32.totalorder %s22, 2
      // Predicated region
      $region13: #{tpu_custom_call.1} parent=5 // pred_check
        %p156 = pneg %p155
      $region14: #{tpu_custom_call.1} parent=5 // pred_check_branch
        %158 = sbr.rel (%p156) target = $region16
      $region15: #{tpu_custom_call.1} parent=5 // pred_region
        // Predicated region
        $region17: #{tpu_custom_call.1} parent=15 // pred_check
          %p159 = pneg %p54
        $region18: #{tpu_custom_call.1} parent=15 // pred_check_branch
          %161 = sbr.rel (%p159) target = $region20
        $region19: #{tpu_custom_call.1} parent=15 // pred_region
          %s162 = sand.u32 %s44, 1
          %s163 = scalar_lea.sflag [#allocation4], %s162
          %s164 = sand.u32 %s44, 1
          %s165 = scalar_lea.vmem [#allocation3], %s164
          %167 = vsyncadd %s163, 0
          %s168 = scalar_lea.hbm %s0, %s29
          %s170 = sshll.u32 %s168, 4
          %s171 = int_to_ptr.hbm [resolvable:$true] %s170
          %s172 = sshll.u32 %s165, 4
          %s173 = int_to_ptr.vmem [resolvable:$true] %s172
          %175 = dma.hbm_to_vmem [thread:$0]  %s171, 16, %s173, %s163
        $region20: #{tpu_custom_call.1} parent=15 // pred_fallthru
          _
        // Predicated region
        $region21: #{tpu_custom_call.1} parent=15 // pred_check
          %p176 = pneg %p82
        $region22: #{tpu_custom_call.1} parent=15 // pred_check_branch
          %178 = sbr.rel (%p176) target = $region24
        $region23: #{tpu_custom_call.1} parent=15 // pred_region
          %s179 = sand.u32 %s72, 1
          %s180 = scalar_lea.sflag [#allocation7], %s179
          %s181 = sand.u32 %s72, 1
          %s182 = smul.addr %s181, 2
          %s183 = scalar_lea.vmem [#allocation6], %s182
          %s184 = smul.u32 2, %s30
          %186 = vsyncadd %s180, 0
          %s187 = smul.addr %s29, 2
          %s188 = sadd.s32 %s184, %s187
          %s189 = scalar_lea.hbm %s1, %s188
          %s191 = sshll.u32 %s189, 4
          %s192 = int_to_ptr.hbm [resolvable:$true] %s191
          %s193 = sshll.u32 %s183, 4
          %s194 = int_to_ptr.vmem [resolvable:$true] %s193
          %196 = dma.hbm_to_vmem [thread:$0]  %s192, 32, %s194, %s180
        $region24: #{tpu_custom_call.1} parent=15 // pred_fallthru
          _
      $region16: #{tpu_custom_call.1} parent=5 // pred_fallthru
        _
      %p197 = scmp.le.s32.totalorder 1, %s22
      %p198 = scmp.lt.s32.totalorder %s22, 3
      %p199 = pnand %p197, %p198
      %p200 = pneg %p199
      // Predicated region
      $region25: #{tpu_custom_call.1} parent=5 // pred_check
        _
      $region26: #{tpu_custom_call.1} parent=5 // pred_check_branch
        %202 = sbr.rel (%p199) target = $region28
      $region27: #{tpu_custom_call.1} parent=5 // pred_region
        %s203 = ssub.s32 %s22, 1
        %s204 = sand.u32 %s47, 1
        %s205 = scalar_lea.sflag [#allocation4], %s204
        %s206 = sand.u32 %s47, 1
        %s207 = scalar_lea.vmem [#allocation3], %s206
        // Predicated region
        $region29: #{tpu_custom_call.1} parent=27 // pred_check
          %p208 = pneg %p60
        $region30: #{tpu_custom_call.1} parent=27 // pred_check_branch
          %210 = sbr.rel (%p208) target = $region32
        $region31: #{tpu_custom_call.1} parent=27 // pred_region
          %212 = dma.done %s205, 16
        $region32: #{tpu_custom_call.1} parent=27 // pred_fallthru
          _
        %s213 = sand.u32 %s75, 1
        %s214 = scalar_lea.sflag [#allocation7], %s213
        %s215 = sand.u32 %s75, 1
        %s216 = smul.addr %s215, 2
        %s217 = scalar_lea.vmem [#allocation6], %s216
        // Predicated region
        $region33: #{tpu_custom_call.1} parent=27 // pred_check
          %p218 = pneg %p88
        $region34: #{tpu_custom_call.1} parent=27 // pred_check_branch
          %220 = sbr.rel (%p218) target = $region36
        $region35: #{tpu_custom_call.1} parent=27 // pred_region
          %222 = dma.done %s214, 32
        $region36: #{tpu_custom_call.1} parent=27 // pred_fallthru
          _
        %s223 = sand.u32 %s47, 1
        %s224 = scalar_lea.sflag [#allocation4], %s223
        %s225 = sand.u32 %s47, 1
        %s226 = scalar_lea.vmem [#allocation3], %s225
        %p227 = pneg %p60
        %p228 = pneg %p57
        %s229 = sand.u32 %s75, 1
        %s230 = scalar_lea.sflag [#allocation7], %s229
        %s231 = sand.u32 %s75, 1
        %s232 = smul.addr %s231, 2
        %s233 = scalar_lea.vmem [#allocation6], %s232
        %p234 = pneg %p88
        %p235 = pneg %p85
        %p236 = pneg %p114
        %p237 = pneg %p111
        %s238 = sand.u32 %s101, 1
        %s239 = scalar_lea.sflag [#allocation5], %s238
        %s240 = sand.u32 %s101, 1
        %s241 = scalar_lea.vmem [#allocation8], %s240
        %p242 = pneg %p140
        %p243 = pneg %p137
        %s244 = sand.u32 %s127, 1
        %s245 = scalar_lea.sflag [#allocation10], %s244
        %s246 = sand.u32 %s127, 1
        %s247 = scalar_lea.vmem [#allocation9], %s246
        %s248 = smul.u32 2, %s32
        %p249 = scmp.eq.s32.totalorder %s32, 0
        // Predicated region
        $region37: #{tpu_custom_call.1} parent=27 // pred_check
          %p250 = pneg %p249
        $region38: #{tpu_custom_call.1} parent=27 // pred_check_branch
          %252 = sbr.rel (%p250) target = $region40
        $region39: #{tpu_custom_call.1} parent=27 // pred_region
          %vm253 = vcmask 7168
          %254 = vst.msk [vmem:[#allocation2] sm:$0xff] %vm253, 0.0
          %255 = vst.msk [vmem:[#allocation2 + $0x8] sm:$0xff] %vm253, 0.0
          %256 = vst.msk [vmem:[#allocation2 + $0x10] sm:$0xff] %vm253, 0.0
          %257 = vst.msk [vmem:[#allocation2 + $0x18] sm:$0xff] %vm253, 0.0
          %258 = vst.msk [vmem:[#allocation2 + $0x20] sm:$0xff] %vm253, 0.0
          %259 = vst.msk [vmem:[#allocation2 + $0x28] sm:$0xff] %vm253, 0.0
          %260 = vst.msk [vmem:[#allocation2 + $0x30] sm:$0xff] %vm253, 0.0
          %261 = vst.msk [vmem:[#allocation2 + $0x38] sm:$0xff] %vm253, 0.0
          %262 = vst.msk [vmem:[#allocation2 + $0x40] sm:$0xff] %vm253, 0.0
          %263 = vst.msk [vmem:[#allocation2 + $0x48] sm:$0xff] %vm253, 0.0
          %264 = vst.msk [vmem:[#allocation2 + $0x50] sm:$0xff] %vm253, 0.0
          %265 = vst.msk [vmem:[#allocation2 + $0x58] sm:$0xff] %vm253, 0.0
          %266 = vst.msk [vmem:[#allocation2 + $0x60] sm:$0xff] %vm253, 0.0
          %267 = vst.msk [vmem:[#allocation2 + $0x68] sm:$0xff] %vm253, 0.0
          %268 = vst.msk [vmem:[#allocation2 + $0x70] sm:$0xff] %vm253, 0.0
          %269 = vst.msk [vmem:[#allocation2 + $0x78] sm:$0xff] %vm253, 0.0
          %270 = vst.msk [vmem:[#allocation2 + $0x80] sm:$0xff] %vm253, 0.0
          %271 = vst.msk [vmem:[#allocation2 + $0x88] sm:$0xff] %vm253, 0.0
          %272 = vst.msk [vmem:[#allocation2 + $0x90] sm:$0xff] %vm253, 0.0
          %273 = vst.msk [vmem:[#allocation2 + $0x98] sm:$0xff] %vm253, 0.0
          %274 = vst.msk [vmem:[#allocation2 + $0xa0] sm:$0xff] %vm253, 0.0
          %275 = vst.msk [vmem:[#allocation2 + $0xa8] sm:$0xff] %vm253, 0.0
          %276 = vst.msk [vmem:[#allocation2 + $0xb0] sm:$0xff] %vm253, 0.0
          %277 = vst.msk [vmem:[#allocation2 + $0xb8] sm:$0xff] %vm253, 0.0
          %278 = vst.msk [vmem:[#allocation2 + $0xc0] sm:$0xff] %vm253, 0.0
          %279 = vst.msk [vmem:[#allocation2 + $0xc8] sm:$0xff] %vm253, 0.0
          %280 = vst.msk [vmem:[#allocation2 + $0xd0] sm:$0xff] %vm253, 0.0
          %281 = vst.msk [vmem:[#allocation2 + $0xd8] sm:$0xff] %vm253, 0.0
          %282 = vst.msk [vmem:[#allocation2 + $0xe0] sm:$0xff] %vm253, 0.0
          %283 = vst.msk [vmem:[#allocation2 + $0xe8] sm:$0xff] %vm253, 0.0
          %284 = vst.msk [vmem:[#allocation2 + $0xf0] sm:$0xff] %vm253, 0.0
          %285 = vst.msk [vmem:[#allocation2 + $0xf8] sm:$0xff] %vm253, 0.0
        $region40: #{tpu_custom_call.1} parent=27 // pred_fallthru
          _
        %v286 = vld [vmem:[%s207] sm:$0x1]
        %288 = vrot.lane.b32.xlu0 %v286, 1
        %v289 = vpop.permute.xlu0 %288
        %v291 = vsub.f32 %v286, %v289
        %vm292 = vcmp.eq.f32.partialorder %v291, 0.0
        %v293 = vsel %vm292, 1.0, %v291
        %v294 = vadd.f32 %v291, 1.0
        %v295 = vfloor.f32 %v294
        %v296 = vmax.f32 %v295, 1.0
        %v297 = vmin.f32 %v296, 256.0
        %v298 = vld [vmem:[%s217] sm:$0x3]
        %299 = vset.pattern.permute.xlu0 0
        %300 = vperm.xlu0 %299, %v286
        %v301 = vpop.permute.xlu0 %300
        %v303 = vperm.slane %v301, 0
        %v304 = vsub.f32 %v298, %v303
        %306 = vset.pattern.permute.xlu0 1
        %307 = vperm.xlu0 %306, %v297
        %v308 = vpop.permute.xlu0 %307
        %v310 = vperm.slane %v308, 0
        %v311 = vmul.f32 %v304, %v310
        %313 = vset.pattern.permute.xlu0 1
        %314 = vperm.xlu0 %313, %v293
        %v315 = vpop.permute.xlu0 %314
        %v317 = vperm.slane %v315, 0
        %v318 = vrcp.pop %v317
        %v319 = vmul.f32 %v317, %v318
        %v320 = vsub.f32 1.0, %v319
        %v321 = vmul.f32 %v318, %v320
        %v322 = vadd.f32 %v318, %v321
        %vm323 = vweird.f32 %v317
        %vm324 = vweird.f32 %v318
        %vm325 = vmor %vm323, %vm324
        %v326 = vsel %vm325, %v318, %v322
        %v327 = vand.u32 2147483647, %v317
        %vm328 = vcmp.eq.f32.partialorder %v327, 8.507059e+37
        %v329 = vand.u32 %v317, 2147483648
        %v330 = vor.u32 1.1754944e-38, %v329
        %v331 = vsel %vm328, %v330, %v326
        %v332 = vmul.f32 %v311, %v331
        %v333 = vfloor.f32 %v332
        %v334 = vsub.f32 %v297, 1.0
        %v335 = vmax.f32 %v333, 0.0
        %337 = vset.pattern.permute.xlu0 1
        %338 = vperm.xlu0 %337, %v334
        %v339 = vpop.permute.xlu0 %338
        %v341 = vperm.slane %v339, 0
        %v342 = vmin.f32 %v341, %v335
        %v343 = vlaneseq
        %v344 = vshrl.u32 %v343, 7
        %v345 = vadd.s32 %v344, 8
        %v346 = vadd.s32 %v344, 16
        %v347 = vadd.s32 %v344, 24
        %v348 = vadd.s32 %v344, 32
        %v349 = vadd.s32 %v344, 40
        %v350 = vadd.s32 %v344, 48
        %v351 = vadd.s32 %v344, 56
        %v352 = vadd.s32 %v344, 64
        %v353 = vadd.s32 %v344, 72
        %v354 = vadd.s32 %v344, 80
        %v355 = vadd.s32 %v344, 88
        %v356 = vadd.s32 %v344, 96
        %v357 = vadd.s32 %v344, 104
        %v358 = vadd.s32 %v344, 112
        %v359 = vadd.s32 %v344, 120
        %v360 = vadd.s32 %v344, 128
        %v361 = vadd.s32 %v344, 136
        %v362 = vadd.s32 %v344, 144
        %v363 = vadd.s32 %v344, 152
        %v364 = vadd.s32 %v344, 160
        %v365 = vadd.s32 %v344, 168
        %v366 = vadd.s32 %v344, 176
        %v367 = vadd.s32 %v344, 184
        %v368 = vadd.s32 %v344, 192
        %v369 = vadd.s32 %v344, 200
        %v370 = vadd.s32 %v344, 208
        %v371 = vadd.s32 %v344, 216
        %v372 = vadd.s32 %v344, 224
        %v373 = vadd.s32 %v344, 232
        %v374 = vadd.s32 %v344, 240
        %v375 = vadd.s32 %v344, 248
        %v376 = vcvt.s32.f32 %v344
        %v377 = vcvt.s32.f32 %v345
        %v378 = vcvt.s32.f32 %v346
        %v379 = vcvt.s32.f32 %v347
        %v380 = vcvt.s32.f32 %v348
        %v381 = vcvt.s32.f32 %v349
        %v382 = vcvt.s32.f32 %v350
        %v383 = vcvt.s32.f32 %v351
        %v384 = vcvt.s32.f32 %v352
        %v385 = vcvt.s32.f32 %v353
        %v386 = vcvt.s32.f32 %v354
        %v387 = vcvt.s32.f32 %v355
        %v388 = vcvt.s32.f32 %v356
        %v389 = vcvt.s32.f32 %v357
        %v390 = vcvt.s32.f32 %v358
        %v391 = vcvt.s32.f32 %v359
        %v392 = vcvt.s32.f32 %v360
        %v393 = vcvt.s32.f32 %v361
        %v394 = vcvt.s32.f32 %v362
        %v395 = vcvt.s32.f32 %v363
        %v396 = vcvt.s32.f32 %v364
        %v397 = vcvt.s32.f32 %v365
        %v398 = vcvt.s32.f32 %v366
        %v399 = vcvt.s32.f32 %v367
        %v400 = vcvt.s32.f32 %v368
        %v401 = vcvt.s32.f32 %v369
        %v402 = vcvt.s32.f32 %v370
        %v403 = vcvt.s32.f32 %v371
        %v404 = vcvt.s32.f32 %v372
        %v405 = vcvt.s32.f32 %v373
        %v406 = vcvt.s32.f32 %v374
        %v407 = vcvt.s32.f32 %v375
        %v409 = vperm.slane %v342, 0
        %v410 = vperm.slane %v342, 1
        %vm413 = vcmp.eq.f32.partialorder %v409, %v376
        %vm414 = vcmp.eq.f32.partialorder %v410, %v376
        %vm415 = vcmp.eq.f32.partialorder %v409, %v377
        %vm416 = vcmp.eq.f32.partialorder %v410, %v377
        %vm417 = vcmp.eq.f32.partialorder %v409, %v378
        %vm418 = vcmp.eq.f32.partialorder %v410, %v378
        %vm419 = vcmp.eq.f32.partialorder %v409, %v379
        %vm420 = vcmp.eq.f32.partialorder %v410, %v379
        %vm421 = vcmp.eq.f32.partialorder %v409, %v380
        %vm422 = vcmp.eq.f32.partialorder %v410, %v380
        %vm423 = vcmp.eq.f32.partialorder %v409, %v381
        %vm424 = vcmp.eq.f32.partialorder %v410, %v381
        %vm425 = vcmp.eq.f32.partialorder %v409, %v382
        %vm426 = vcmp.eq.f32.partialorder %v410, %v382
        %vm427 = vcmp.eq.f32.partialorder %v409, %v383
        %vm428 = vcmp.eq.f32.partialorder %v410, %v383
        %vm429 = vcmp.eq.f32.partialorder %v409, %v384
        %vm430 = vcmp.eq.f32.partialorder %v410, %v384
        %vm431 = vcmp.eq.f32.partialorder %v409, %v385
        %vm432 = vcmp.eq.f32.partialorder %v410, %v385
        %vm433 = vcmp.eq.f32.partialorder %v409, %v386
        %vm434 = vcmp.eq.f32.partialorder %v410, %v386
        %vm435 = vcmp.eq.f32.partialorder %v409, %v387
        %vm436 = vcmp.eq.f32.partialorder %v410, %v387
        %vm437 = vcmp.eq.f32.partialorder %v409, %v388
        %vm438 = vcmp.eq.f32.partialorder %v410, %v388
        %vm439 = vcmp.eq.f32.partialorder %v409, %v389
        %vm440 = vcmp.eq.f32.partialorder %v410, %v389
        %vm441 = vcmp.eq.f32.partialorder %v409, %v390
        %vm442 = vcmp.eq.f32.partialorder %v410, %v390
        %vm443 = vcmp.eq.f32.partialorder %v409, %v391
        %vm444 = vcmp.eq.f32.partialorder %v410, %v391
        %vm445 = vcmp.eq.f32.partialorder %v409, %v392
        %vm446 = vcmp.eq.f32.partialorder %v410, %v392
        %vm447 = vcmp.eq.f32.partialorder %v409, %v393
        %vm448 = vcmp.eq.f32.partialorder %v410, %v393
        %vm449 = vcmp.eq.f32.partialorder %v409, %v394
        %vm450 = vcmp.eq.f32.partialorder %v410, %v394
        %vm451 = vcmp.eq.f32.partialorder %v409, %v395
        %vm452 = vcmp.eq.f32.partialorder %v410, %v395
        %vm453 = vcmp.eq.f32.partialorder %v409, %v396
        %vm454 = vcmp.eq.f32.partialorder %v410, %v396
        %vm455 = vcmp.eq.f32.partialorder %v409, %v397
        %vm456 = vcmp.eq.f32.partialorder %v410, %v397
        %vm457 = vcmp.eq.f32.partialorder %v409, %v398
        %vm458 = vcmp.eq.f32.partialorder %v410, %v398
        %vm459 = vcmp.eq.f32.partialorder %v409, %v399
        %vm460 = vcmp.eq.f32.partialorder %v410, %v399
        %vm461 = vcmp.eq.f32.partialorder %v409, %v400
        %vm462 = vcmp.eq.f32.partialorder %v410, %v400
        %vm463 = vcmp.eq.f32.partialorder %v409, %v401
        %vm464 = vcmp.eq.f32.partialorder %v410, %v401
        %vm465 = vcmp.eq.f32.partialorder %v409, %v402
        %vm466 = vcmp.eq.f32.partialorder %v410, %v402
        %vm467 = vcmp.eq.f32.partialorder %v409, %v403
        %vm468 = vcmp.eq.f32.partialorder %v410, %v403
        %vm469 = vcmp.eq.f32.partialorder %v409, %v404
        %vm470 = vcmp.eq.f32.partialorder %v410, %v404
        %vm471 = vcmp.eq.f32.partialorder %v409, %v405
        %vm472 = vcmp.eq.f32.partialorder %v410, %v405
        %vm473 = vcmp.eq.f32.partialorder %v409, %v406
        %vm474 = vcmp.eq.f32.partialorder %v410, %v406
        %vm475 = vcmp.eq.f32.partialorder %v409, %v407
        %vm476 = vcmp.eq.f32.partialorder %v410, %v407
        %v477 = vsel %vm413, 1, 0
        %v478 = vsel %vm414, 1, 0
        %v479 = vsel %vm415, 1, 0
        %v480 = vsel %vm416, 1, 0
        %v481 = vsel %vm417, 1, 0
        %v482 = vsel %vm418, 1, 0
        %v483 = vsel %vm419, 1, 0
        %v484 = vsel %vm420, 1, 0
        %v485 = vsel %vm421, 1, 0
        %v486 = vsel %vm422, 1, 0
        %v487 = vsel %vm423, 1, 0
        %v488 = vsel %vm424, 1, 0
        %v489 = vsel %vm425, 1, 0
        %v490 = vsel %vm426, 1, 0
        %v491 = vsel %vm427, 1, 0
        %v492 = vsel %vm428, 1, 0
        %v493 = vsel %vm429, 1, 0
        %v494 = vsel %vm430, 1, 0
        %v495 = vsel %vm431, 1, 0
        %v496 = vsel %vm432, 1, 0
        %v497 = vsel %vm433, 1, 0
        %v498 = vsel %vm434, 1, 0
        %v499 = vsel %vm435, 1, 0
        %v500 = vsel %vm436, 1, 0
        %v501 = vsel %vm437, 1, 0
        %v502 = vsel %vm438, 1, 0
        %v503 = vsel %vm439, 1, 0
        %v504 = vsel %vm440, 1, 0
        %v505 = vsel %vm441, 1, 0
        %v506 = vsel %vm442, 1, 0
        %v507 = vsel %vm443, 1, 0
        %v508 = vsel %vm444, 1, 0
        %v509 = vsel %vm445, 1, 0
        %v510 = vsel %vm446, 1, 0
        %v511 = vsel %vm447, 1, 0
        %v512 = vsel %vm448, 1, 0
        %v513 = vsel %vm449, 1, 0
        %v514 = vsel %vm450, 1, 0
        %v515 = vsel %vm451, 1, 0
        %v516 = vsel %vm452, 1, 0
        %v517 = vsel %vm453, 1, 0
        %v518 = vsel %vm454, 1, 0
        %v519 = vsel %vm455, 1, 0
        %v520 = vsel %vm456, 1, 0
        %v521 = vsel %vm457, 1, 0
        %v522 = vsel %vm458, 1, 0
        %v523 = vsel %vm459, 1, 0
        %v524 = vsel %vm460, 1, 0
        %v525 = vsel %vm461, 1, 0
        %v526 = vsel %vm462, 1, 0
        %v527 = vsel %vm463, 1, 0
        %v528 = vsel %vm464, 1, 0
        %v529 = vsel %vm465, 1, 0
        %v530 = vsel %vm466, 1, 0
        %v531 = vsel %vm467, 1, 0
        %v532 = vsel %vm468, 1, 0
        %v533 = vsel %vm469, 1, 0
        %v534 = vsel %vm470, 1, 0
        %v535 = vsel %vm471, 1, 0
        %v536 = vsel %vm472, 1, 0
        %v537 = vsel %vm473, 1, 0
        %v538 = vsel %vm474, 1, 0
        %v539 = vsel %vm475, 1, 0
        %v540 = vsel %vm476, 1, 0
        %v541 = vcvt.s32.f32 %v477
        %v542 = vcvt.s32.f32 %v478
        %v543 = vcvt.s32.f32 %v479
        %v544 = vcvt.s32.f32 %v480
        %v545 = vcvt.s32.f32 %v481
        %v546 = vcvt.s32.f32 %v482
        %v547 = vcvt.s32.f32 %v483
        %v548 = vcvt.s32.f32 %v484
        %v549 = vcvt.s32.f32 %v485
        %v550 = vcvt.s32.f32 %v486
        %v551 = vcvt.s32.f32 %v487
        %v552 = vcvt.s32.f32 %v488
        %v553 = vcvt.s32.f32 %v489
        %v554 = vcvt.s32.f32 %v490
        %v555 = vcvt.s32.f32 %v491
        %v556 = vcvt.s32.f32 %v492
        %v557 = vcvt.s32.f32 %v493
        %v558 = vcvt.s32.f32 %v494
        %v559 = vcvt.s32.f32 %v495
        %v560 = vcvt.s32.f32 %v496
        %v561 = vcvt.s32.f32 %v497
        %v562 = vcvt.s32.f32 %v498
        %v563 = vcvt.s32.f32 %v499
        %v564 = vcvt.s32.f32 %v500
        %v565 = vcvt.s32.f32 %v501
        %v566 = vcvt.s32.f32 %v502
        %v567 = vcvt.s32.f32 %v503
        %v568 = vcvt.s32.f32 %v504
        %v569 = vcvt.s32.f32 %v505
        %v570 = vcvt.s32.f32 %v506
        %v571 = vcvt.s32.f32 %v507
        %v572 = vcvt.s32.f32 %v508
        %v573 = vcvt.s32.f32 %v509
        %v574 = vcvt.s32.f32 %v510
        %v575 = vcvt.s32.f32 %v511
        %v576 = vcvt.s32.f32 %v512
        %v577 = vcvt.s32.f32 %v513
        %v578 = vcvt.s32.f32 %v514
        %v579 = vcvt.s32.f32 %v515
        %v580 = vcvt.s32.f32 %v516
        %v581 = vcvt.s32.f32 %v517
        %v582 = vcvt.s32.f32 %v518
        %v583 = vcvt.s32.f32 %v519
        %v584 = vcvt.s32.f32 %v520
        %v585 = vcvt.s32.f32 %v521
        %v586 = vcvt.s32.f32 %v522
        %v587 = vcvt.s32.f32 %v523
        %v588 = vcvt.s32.f32 %v524
        %v589 = vcvt.s32.f32 %v525
        %v590 = vcvt.s32.f32 %v526
        %v591 = vcvt.s32.f32 %v527
        %v592 = vcvt.s32.f32 %v528
        %v593 = vcvt.s32.f32 %v529
        %v594 = vcvt.s32.f32 %v530
        %v595 = vcvt.s32.f32 %v531
        %v596 = vcvt.s32.f32 %v532
        %v597 = vcvt.s32.f32 %v533
        %v598 = vcvt.s32.f32 %v534
        %v599 = vcvt.s32.f32 %v535
        %v600 = vcvt.s32.f32 %v536
        %v601 = vcvt.s32.f32 %v537
        %v602 = vcvt.s32.f32 %v538
        %v603 = vcvt.s32.f32 %v539
        %v604 = vcvt.s32.f32 %v540
        %v605 = vld [vmem:[#allocation2] sm:$0xff]
        %v606 = vld [vmem:[#allocation2 + $0x8] sm:$0xff]
        %v607 = vld [vmem:[#allocation2 + $0x10] sm:$0xff]
        %v608 = vld [vmem:[#allocation2 + $0x18] sm:$0xff]
        %v609 = vld [vmem:[#allocation2 + $0x20] sm:$0xff]
        %v610 = vld [vmem:[#allocation2 + $0x28] sm:$0xff]
        %v611 = vld [vmem:[#allocation2 + $0x30] sm:$0xff]
        %v612 = vld [vmem:[#allocation2 + $0x38] sm:$0xff]
        %v613 = vld [vmem:[#allocation2 + $0x40] sm:$0xff]
        %v614 = vld [vmem:[#allocation2 + $0x48] sm:$0xff]
        %v615 = vld [vmem:[#allocation2 + $0x50] sm:$0xff]
        %v616 = vld [vmem:[#allocation2 + $0x58] sm:$0xff]
        %v617 = vld [vmem:[#allocation2 + $0x60] sm:$0xff]
        %v618 = vld [vmem:[#allocation2 + $0x68] sm:$0xff]
        %v619 = vld [vmem:[#allocation2 + $0x70] sm:$0xff]
        %v620 = vld [vmem:[#allocation2 + $0x78] sm:$0xff]
        %v621 = vld [vmem:[#allocation2 + $0x80] sm:$0xff]
        %v622 = vld [vmem:[#allocation2 + $0x88] sm:$0xff]
        %v623 = vld [vmem:[#allocation2 + $0x90] sm:$0xff]
        %v624 = vld [vmem:[#allocation2 + $0x98] sm:$0xff]
        %v625 = vld [vmem:[#allocation2 + $0xa0] sm:$0xff]
        %v626 = vld [vmem:[#allocation2 + $0xa8] sm:$0xff]
        %v627 = vld [vmem:[#allocation2 + $0xb0] sm:$0xff]
        %v628 = vld [vmem:[#allocation2 + $0xb8] sm:$0xff]
        %v629 = vld [vmem:[#allocation2 + $0xc0] sm:$0xff]
        %v630 = vld [vmem:[#allocation2 + $0xc8] sm:$0xff]
        %v631 = vld [vmem:[#allocation2 + $0xd0] sm:$0xff]
        %v632 = vld [vmem:[#allocation2 + $0xd8] sm:$0xff]
        %v633 = vld [vmem:[#allocation2 + $0xe0] sm:$0xff]
        %v634 = vld [vmem:[#allocation2 + $0xe8] sm:$0xff]
        %v635 = vld [vmem:[#allocation2 + $0xf0] sm:$0xff]
        %v636 = vld [vmem:[#allocation2 + $0xf8] sm:$0xff]
        %v637 = vadd.f32 %v541, %v542
        %638 = vadd.xlane.f32.xlu0 %v637
        %v639 = vpop.xlane.xlu0 %638
        %v640 = vadd.f32 %v543, %v544
        %641 = vadd.xlane.f32.xlu0 %v640
        %v642 = vpop.xlane.xlu0 %641
        %v643 = vadd.f32 %v545, %v546
        %644 = vadd.xlane.f32.xlu0 %v643
        %v645 = vpop.xlane.xlu0 %644
        %v646 = vadd.f32 %v547, %v548
        %647 = vadd.xlane.f32.xlu0 %v646
        %v648 = vpop.xlane.xlu0 %647
        %v649 = vadd.f32 %v549, %v550
        %650 = vadd.xlane.f32.xlu0 %v649
        %v651 = vpop.xlane.xlu0 %650
        %v652 = vadd.f32 %v551, %v552
        %653 = vadd.xlane.f32.xlu0 %v652
        %v654 = vpop.xlane.xlu0 %653
        %v655 = vadd.f32 %v553, %v554
        %656 = vadd.xlane.f32.xlu0 %v655
        %v657 = vpop.xlane.xlu0 %656
        %v658 = vadd.f32 %v555, %v556
        %659 = vadd.xlane.f32.xlu0 %v658
        %v660 = vpop.xlane.xlu0 %659
        %v661 = vadd.f32 %v557, %v558
        %662 = vadd.xlane.f32.xlu0 %v661
        %v663 = vpop.xlane.xlu0 %662
        %v664 = vadd.f32 %v559, %v560
        %665 = vadd.xlane.f32.xlu0 %v664
        %v666 = vpop.xlane.xlu0 %665
        %v667 = vadd.f32 %v561, %v562
        %668 = vadd.xlane.f32.xlu0 %v667
        %v669 = vpop.xlane.xlu0 %668
        %v670 = vadd.f32 %v563, %v564
        %671 = vadd.xlane.f32.xlu0 %v670
        %v672 = vpop.xlane.xlu0 %671
        %v673 = vadd.f32 %v565, %v566
        %674 = vadd.xlane.f32.xlu0 %v673
        %v675 = vpop.xlane.xlu0 %674
        %v676 = vadd.f32 %v567, %v568
        %677 = vadd.xlane.f32.xlu0 %v676
        %v678 = vpop.xlane.xlu0 %677
        %v679 = vadd.f32 %v569, %v570
        %680 = vadd.xlane.f32.xlu0 %v679
        %v681 = vpop.xlane.xlu0 %680
        %v682 = vadd.f32 %v571, %v572
        %683 = vadd.xlane.f32.xlu0 %v682
        %v684 = vpop.xlane.xlu0 %683
        %v685 = vadd.f32 %v573, %v574
        %686 = vadd.xlane.f32.xlu0 %v685
        %v687 = vpop.xlane.xlu0 %686
        %v688 = vadd.f32 %v575, %v576
        %689 = vadd.xlane.f32.xlu0 %v688
        %v690 = vpop.xlane.xlu0 %689
        %v691 = vadd.f32 %v577, %v578
        %692 = vadd.xlane.f32.xlu0 %v691
        %v693 = vpop.xlane.xlu0 %692
        %v694 = vadd.f32 %v579, %v580
        %695 = vadd.xlane.f32.xlu0 %v694
        %v696 = vpop.xlane.xlu0 %695
        %v697 = vadd.f32 %v581, %v582
        %698 = vadd.xlane.f32.xlu0 %v697
        %v699 = vpop.xlane.xlu0 %698
        %v700 = vadd.f32 %v583, %v584
        %701 = vadd.xlane.f32.xlu0 %v700
        %v702 = vpop.xlane.xlu0 %701
        %v703 = vadd.f32 %v585, %v586
        %704 = vadd.xlane.f32.xlu0 %v703
        %v705 = vpop.xlane.xlu0 %704
        %v706 = vadd.f32 %v587, %v588
        %707 = vadd.xlane.f32.xlu0 %v706
        %v708 = vpop.xlane.xlu0 %707
        %v709 = vadd.f32 %v589, %v590
        %710 = vadd.xlane.f32.xlu0 %v709
        %v711 = vpop.xlane.xlu0 %710
        %v712 = vadd.f32 %v591, %v592
        %713 = vadd.xlane.f32.xlu0 %v712
        %v714 = vpop.xlane.xlu0 %713
        %v715 = vadd.f32 %v593, %v594
        %716 = vadd.xlane.f32.xlu0 %v715
        %v717 = vpop.xlane.xlu0 %716
        %v718 = vadd.f32 %v595, %v596
        %719 = vadd.xlane.f32.xlu0 %v718
        %v720 = vpop.xlane.xlu0 %719
        %v721 = vadd.f32 %v597, %v598
        %722 = vadd.xlane.f32.xlu0 %v721
        %v723 = vpop.xlane.xlu0 %722
        %v724 = vadd.f32 %v599, %v600
        %725 = vadd.xlane.f32.xlu0 %v724
        %v726 = vpop.xlane.xlu0 %725
        %v727 = vadd.f32 %v601, %v602
        %728 = vadd.xlane.f32.xlu0 %v727
        %v729 = vpop.xlane.xlu0 %728
        %v730 = vadd.f32 %v603, %v604
        %731 = vadd.xlane.f32.xlu0 %v730
        %v732 = vpop.xlane.xlu0 %731
        %v733 = vadd.f32 %v605, %v639
        %v734 = vadd.f32 %v606, %v642
        %v735 = vadd.f32 %v607, %v645
        %v736 = vadd.f32 %v608, %v648
        %v737 = vadd.f32 %v609, %v651
        %v738 = vadd.f32 %v610, %v654
        %v739 = vadd.f32 %v611, %v657
        %v740 = vadd.f32 %v612, %v660
        %v741 = vadd.f32 %v613, %v663
        %v742 = vadd.f32 %v614, %v666
        %v743 = vadd.f32 %v615, %v669
        %v744 = vadd.f32 %v616, %v672
        %v745 = vadd.f32 %v617, %v675
        %v746 = vadd.f32 %v618, %v678
        %v747 = vadd.f32 %v619, %v681
        %v748 = vadd.f32 %v620, %v684
        %v749 = vadd.f32 %v621, %v687
        %v750 = vadd.f32 %v622, %v690
        %v751 = vadd.f32 %v623, %v693
        %v752 = vadd.f32 %v624, %v696
        %v753 = vadd.f32 %v625, %v699
        %v754 = vadd.f32 %v626, %v702
        %v755 = vadd.f32 %v627, %v705
        %v756 = vadd.f32 %v628, %v708
        %v757 = vadd.f32 %v629, %v711
        %v758 = vadd.f32 %v630, %v714
        %v759 = vadd.f32 %v631, %v717
        %v760 = vadd.f32 %v632, %v720
        %v761 = vadd.f32 %v633, %v723
        %v762 = vadd.f32 %v634, %v726
        %v763 = vadd.f32 %v635, %v729
        %v764 = vadd.f32 %v636, %v732
        %vm765 = vcmask 7168
        %766 = vst.msk [vmem:[#allocation2] sm:$0xff] %vm765, %v733
        %767 = vst.msk [vmem:[#allocation2 + $0x8] sm:$0xff] %vm765, %v734
        %768 = vst.msk [vmem:[#allocation2 + $0x10] sm:$0xff] %vm765, %v735
        %769 = vst.msk [vmem:[#allocation2 + $0x18] sm:$0xff] %vm765, %v736
        %770 = vst.msk [vmem:[#allocation2 + $0x20] sm:$0xff] %vm765, %v737
        %771 = vst.msk [vmem:[#allocation2 + $0x28] sm:$0xff] %vm765, %v738
        %772 = vst.msk [vmem:[#allocation2 + $0x30] sm:$0xff] %vm765, %v739
        %773 = vst.msk [vmem:[#allocation2 + $0x38] sm:$0xff] %vm765, %v740
        %774 = vst.msk [vmem:[#allocation2 + $0x40] sm:$0xff] %vm765, %v741
        %775 = vst.msk [vmem:[#allocation2 + $0x48] sm:$0xff] %vm765, %v742
        %776 = vst.msk [vmem:[#allocation2 + $0x50] sm:$0xff] %vm765, %v743
        %777 = vst.msk [vmem:[#allocation2 + $0x58] sm:$0xff] %vm765, %v744
        %778 = vst.msk [vmem:[#allocation2 + $0x60] sm:$0xff] %vm765, %v745
        %779 = vst.msk [vmem:[#allocation2 + $0x68] sm:$0xff] %vm765, %v746
        %780 = vst.msk [vmem:[#allocation2 + $0x70] sm:$0xff] %vm765, %v747
        %781 = vst.msk [vmem:[#allocation2 + $0x78] sm:$0xff] %vm765, %v748
        %782 = vst.msk [vmem:[#allocation2 + $0x80] sm:$0xff] %vm765, %v749
        %783 = vst.msk [vmem:[#allocation2 + $0x88] sm:$0xff] %vm765, %v750
        %784 = vst.msk [vmem:[#allocation2 + $0x90] sm:$0xff] %vm765, %v751
        %785 = vst.msk [vmem:[#allocation2 + $0x98] sm:$0xff] %vm765, %v752
        %786 = vst.msk [vmem:[#allocation2 + $0xa0] sm:$0xff] %vm765, %v753
        %787 = vst.msk [vmem:[#allocation2 + $0xa8] sm:$0xff] %vm765, %v754
        %788 = vst.msk [vmem:[#allocation2 + $0xb0] sm:$0xff] %vm765, %v755
        %789 = vst.msk [vmem:[#allocation2 + $0xb8] sm:$0xff] %vm765, %v756
        %790 = vst.msk [vmem:[#allocation2 + $0xc0] sm:$0xff] %vm765, %v757
        %791 = vst.msk [vmem:[#allocation2 + $0xc8] sm:$0xff] %vm765, %v758
        %792 = vst.msk [vmem:[#allocation2 + $0xd0] sm:$0xff] %vm765, %v759
        %793 = vst.msk [vmem:[#allocation2 + $0xd8] sm:$0xff] %vm765, %v760
        %794 = vst.msk [vmem:[#allocation2 + $0xe0] sm:$0xff] %vm765, %v761
        %795 = vst.msk [vmem:[#allocation2 + $0xe8] sm:$0xff] %vm765, %v762
        %796 = vst.msk [vmem:[#allocation2 + $0xf0] sm:$0xff] %vm765, %v763
        %797 = vst.msk [vmem:[#allocation2 + $0xf8] sm:$0xff] %vm765, %v764
        // Predicated region
        $region41: #{tpu_custom_call.1} parent=27 // pred_check
          %p798 = pneg %p249
        $region42: #{tpu_custom_call.1} parent=27 // pred_check_branch
          %800 = sbr.rel (%p798) target = $region44
        $region43: #{tpu_custom_call.1} parent=27 // pred_region
          %v801 = vld [vmem:[#allocation2] sm:$0xff]
          %v802 = vld [vmem:[#allocation2 + $0x8] sm:$0xff]
          %v803 = vld [vmem:[#allocation2 + $0x10] sm:$0xff]
          %v804 = vld [vmem:[#allocation2 + $0x18] sm:$0xff]
          %v805 = vld [vmem:[#allocation2 + $0x20] sm:$0xff]
          %v806 = vld [vmem:[#allocation2 + $0x28] sm:$0xff]
          %v807 = vld [vmem:[#allocation2 + $0x30] sm:$0xff]
          %v808 = vld [vmem:[#allocation2 + $0x38] sm:$0xff]
          %v809 = vld [vmem:[#allocation2 + $0x40] sm:$0xff]
          %v810 = vld [vmem:[#allocation2 + $0x48] sm:$0xff]
          %v811 = vld [vmem:[#allocation2 + $0x50] sm:$0xff]
          %v812 = vld [vmem:[#allocation2 + $0x58] sm:$0xff]
          %v813 = vld [vmem:[#allocation2 + $0x60] sm:$0xff]
          %v814 = vld [vmem:[#allocation2 + $0x68] sm:$0xff]
          %v815 = vld [vmem:[#allocation2 + $0x70] sm:$0xff]
          %v816 = vld [vmem:[#allocation2 + $0x78] sm:$0xff]
          %v817 = vld [vmem:[#allocation2 + $0x80] sm:$0xff]
          %v818 = vld [vmem:[#allocation2 + $0x88] sm:$0xff]
          %v819 = vld [vmem:[#allocation2 + $0x90] sm:$0xff]
          %v820 = vld [vmem:[#allocation2 + $0x98] sm:$0xff]
          %v821 = vld [vmem:[#allocation2 + $0xa0] sm:$0xff]
          %v822 = vld [vmem:[#allocation2 + $0xa8] sm:$0xff]
          %v823 = vld [vmem:[#allocation2 + $0xb0] sm:$0xff]
          %v824 = vld [vmem:[#allocation2 + $0xb8] sm:$0xff]
          %v825 = vld [vmem:[#allocation2 + $0xc0] sm:$0xff]
          %v826 = vld [vmem:[#allocation2 + $0xc8] sm:$0xff]
          %v827 = vld [vmem:[#allocation2 + $0xd0] sm:$0xff]
          %v828 = vld [vmem:[#allocation2 + $0xd8] sm:$0xff]
          %v829 = vld [vmem:[#allocation2 + $0xe0] sm:$0xff]
          %v830 = vld [vmem:[#allocation2 + $0xe8] sm:$0xff]
          %v831 = vld [vmem:[#allocation2 + $0xf0] sm:$0xff]
          %v832 = vld [vmem:[#allocation2 + $0xf8] sm:$0xff]
          %v833 = vlaneseq
          %v834 = vand.u32 %v833, 127
          %v835 = vadd.s32 %v834, 128
          %v836 = vcvt.s32.f32 %v834
          %v837 = vcvt.s32.f32 %v835
          %vm838 = vcmp.le.f32.partialorder %v376, %v836
          %vm839 = vcmp.le.f32.partialorder %v376, %v837
          %vm840 = vcmp.le.f32.partialorder %v377, %v836
          %vm841 = vcmp.le.f32.partialorder %v377, %v837
          %vm842 = vcmp.le.f32.partialorder %v378, %v836
          %vm843 = vcmp.le.f32.partialorder %v378, %v837
          %vm844 = vcmp.le.f32.partialorder %v379, %v836
          %vm845 = vcmp.le.f32.partialorder %v379, %v837
          %vm846 = vcmp.le.f32.partialorder %v380, %v836
          %vm847 = vcmp.le.f32.partialorder %v380, %v837
          %vm848 = vcmp.le.f32.partialorder %v381, %v836
          %vm849 = vcmp.le.f32.partialorder %v381, %v837
          %vm850 = vcmp.le.f32.partialorder %v382, %v836
          %vm851 = vcmp.le.f32.partialorder %v382, %v837
          %vm852 = vcmp.le.f32.partialorder %v383, %v836
          %vm853 = vcmp.le.f32.partialorder %v383, %v837
          %vm854 = vcmp.le.f32.partialorder %v384, %v836
          %vm855 = vcmp.le.f32.partialorder %v384, %v837
          %vm856 = vcmp.le.f32.partialorder %v385, %v836
          %vm857 = vcmp.le.f32.partialorder %v385, %v837
          %vm858 = vcmp.le.f32.partialorder %v386, %v836
          %vm859 = vcmp.le.f32.partialorder %v386, %v837
          %vm860 = vcmp.le.f32.partialorder %v387, %v836
          %vm861 = vcmp.le.f32.partialorder %v387, %v837
          %vm862 = vcmp.le.f32.partialorder %v388, %v836
          %vm863 = vcmp.le.f32.partialorder %v388, %v837
          %vm864 = vcmp.le.f32.partialorder %v389, %v836
          %vm865 = vcmp.le.f32.partialorder %v389, %v837
          %vm866 = vcmp.le.f32.partialorder %v390, %v836
          %vm867 = vcmp.le.f32.partialorder %v390, %v837
          %vm868 = vcmp.le.f32.partialorder %v391, %v836
          %vm869 = vcmp.le.f32.partialorder %v391, %v837
          %vm870 = vcmp.le.f32.partialorder %v392, %v836
          %vm871 = vcmp.le.f32.partialorder %v392, %v837
          %vm872 = vcmp.le.f32.partialorder %v393, %v836
          %vm873 = vcmp.le.f32.partialorder %v393, %v837
          %vm874 = vcmp.le.f32.partialorder %v394, %v836
          %vm875 = vcmp.le.f32.partialorder %v394, %v837
          %vm876 = vcmp.le.f32.partialorder %v395, %v836
          %vm877 = vcmp.le.f32.partialorder %v395, %v837
          %vm878 = vcmp.le.f32.partialorder %v396, %v836
          %vm879 = vcmp.le.f32.partialorder %v396, %v837
          %vm880 = vcmp.le.f32.partialorder %v397, %v836
          %vm881 = vcmp.le.f32.partialorder %v397, %v837
          %vm882 = vcmp.le.f32.partialorder %v398, %v836
          %vm883 = vcmp.le.f32.partialorder %v398, %v837
          %vm884 = vcmp.le.f32.partialorder %v399, %v836
          %vm885 = vcmp.le.f32.partialorder %v399, %v837
          %vm886 = vcmp.le.f32.partialorder %v400, %v836
          %vm887 = vcmp.le.f32.partialorder %v400, %v837
          %vm888 = vcmp.le.f32.partialorder %v401, %v836
          %vm889 = vcmp.le.f32.partialorder %v401, %v837
          %vm890 = vcmp.le.f32.partialorder %v402, %v836
          %vm891 = vcmp.le.f32.partialorder %v402, %v837
          %vm892 = vcmp.le.f32.partialorder %v403, %v836
          %vm893 = vcmp.le.f32.partialorder %v403, %v837
          %vm894 = vcmp.le.f32.partialorder %v404, %v836
          %vm895 = vcmp.le.f32.partialorder %v404, %v837
          %vm896 = vcmp.le.f32.partialorder %v405, %v836
          %vm897 = vcmp.le.f32.partialorder %v405, %v837
          %vm898 = vcmp.le.f32.partialorder %v406, %v836
          %vm899 = vcmp.le.f32.partialorder %v406, %v837
          %vm900 = vcmp.le.f32.partialorder %v407, %v836
          %vm901 = vcmp.le.f32.partialorder %v407, %v837
          %903 = vset.pattern.permute.xlu0 0
          %904 = vperm.xlu0 %903, %v801
          %v905 = vpop.permute.xlu0 %904
          %908 = vset.pattern.permute.xlu0 0
          %909 = vperm.xlu0 %908, %v802
          %v910 = vpop.permute.xlu0 %909
          %913 = vset.pattern.permute.xlu0 0
          %914 = vperm.xlu0 %913, %v803
          %v915 = vpop.permute.xlu0 %914
          %918 = vset.pattern.permute.xlu0 0
          %919 = vperm.xlu0 %918, %v804
          %v920 = vpop.permute.xlu0 %919
          %923 = vset.pattern.permute.xlu0 0
          %924 = vperm.xlu0 %923, %v805
          %v925 = vpop.permute.xlu0 %924
          %928 = vset.pattern.permute.xlu0 0
          %929 = vperm.xlu0 %928, %v806
          %v930 = vpop.permute.xlu0 %929
          %933 = vset.pattern.permute.xlu0 0
          %934 = vperm.xlu0 %933, %v807
          %v935 = vpop.permute.xlu0 %934
          %938 = vset.pattern.permute.xlu0 0
          %939 = vperm.xlu0 %938, %v808
          %v940 = vpop.permute.xlu0 %939
          %943 = vset.pattern.permute.xlu0 0
          %944 = vperm.xlu0 %943, %v809
          %v945 = vpop.permute.xlu0 %944
          %948 = vset.pattern.permute.xlu0 0
          %949 = vperm.xlu0 %948, %v810
          %v950 = vpop.permute.xlu0 %949
          %953 = vset.pattern.permute.xlu0 0
          %954 = vperm.xlu0 %953, %v811
          %v955 = vpop.permute.xlu0 %954
          %958 = vset.pattern.permute.xlu0 0
          %959 = vperm.xlu0 %958, %v812
          %v960 = vpop.permute.xlu0 %959
          %963 = vset.pattern.permute.xlu0 0
          %964 = vperm.xlu0 %963, %v813
          %v965 = vpop.permute.xlu0 %964
          %968 = vset.pattern.permute.xlu0 0
          %969 = vperm.xlu0 %968, %v814
          %v970 = vpop.permute.xlu0 %969
          %973 = vset.pattern.permute.xlu0 0
          %974 = vperm.xlu0 %973, %v815
          %v975 = vpop.permute.xlu0 %974
          %978 = vset.pattern.permute.xlu0 0
          %979 = vperm.xlu0 %978, %v816
          %v980 = vpop.permute.xlu0 %979
          %983 = vset.pattern.permute.xlu0 0
          %984 = vperm.xlu0 %983, %v817
          %v985 = vpop.permute.xlu0 %984
          %988 = vset.pattern.permute.xlu0 0
          %989 = vperm.xlu0 %988, %v818
          %v990 = vpop.permute.xlu0 %989
          %993 = vset.pattern.permute.xlu0 0
          %994 = vperm.xlu0 %993, %v819
          %v995 = vpop.permute.xlu0 %994
          %998 = vset.pattern.permute.xlu0 0
          %999 = vperm.xlu0 %998, %v820
          %v1000 = vpop.permute.xlu0 %999
          %1003 = vset.pattern.permute.xlu0 0
          %1004 = vperm.xlu0 %1003, %v821
          %v1005 = vpop.permute.xlu0 %1004
          %1008 = vset.pattern.permute.xlu0 0
          %1009 = vperm.xlu0 %1008, %v822
          %v1010 = vpop.permute.xlu0 %1009
          %1013 = vset.pattern.permute.xlu0 0
          %1014 = vperm.xlu0 %1013, %v823
          %v1015 = vpop.permute.xlu0 %1014
          %1018 = vset.pattern.permute.xlu0 0
          %1019 = vperm.xlu0 %1018, %v824
          %v1020 = vpop.permute.xlu0 %1019
          %1023 = vset.pattern.permute.xlu0 0
          %1024 = vperm.xlu0 %1023, %v825
          %v1025 = vpop.permute.xlu0 %1024
          %1028 = vset.pattern.permute.xlu0 0
          %1029 = vperm.xlu0 %1028, %v826
          %v1030 = vpop.permute.xlu0 %1029
          %1033 = vset.pattern.permute.xlu0 0
          %1034 = vperm.xlu0 %1033, %v827
          %v1035 = vpop.permute.xlu0 %1034
          %1038 = vset.pattern.permute.xlu0 0
          %1039 = vperm.xlu0 %1038, %v828
          %v1040 = vpop.permute.xlu0 %1039
          %1043 = vset.pattern.permute.xlu0 0
          %1044 = vperm.xlu0 %1043, %v829
          %v1045 = vpop.permute.xlu0 %1044
          %1048 = vset.pattern.permute.xlu0 0
          %1049 = vperm.xlu0 %1048, %v830
          %v1050 = vpop.permute.xlu0 %1049
          %1053 = vset.pattern.permute.xlu0 0
          %1054 = vperm.xlu0 %1053, %v831
          %v1055 = vpop.permute.xlu0 %1054
          %1058 = vset.pattern.permute.xlu0 0
          %1059 = vperm.xlu0 %1058, %v832
          %v1060 = vpop.permute.xlu0 %1059
          %v1062 = vsel %vm838, %v905, 0.0
          %v1063 = vsel %vm839, %v905, 0.0
          %v1064 = vsel %vm840, %v910, 0.0
          %v1065 = vsel %vm841, %v910, 0.0
          %v1066 = vsel %vm842, %v915, 0.0
          %v1067 = vsel %vm843, %v915, 0.0
          %v1068 = vsel %vm844, %v920, 0.0
          %v1069 = vsel %vm845, %v920, 0.0
          %v1070 = vsel %vm846, %v925, 0.0
          %v1071 = vsel %vm847, %v925, 0.0
          %v1072 = vsel %vm848, %v930, 0.0
          %v1073 = vsel %vm849, %v930, 0.0
          %v1074 = vsel %vm850, %v935, 0.0
          %v1075 = vsel %vm851, %v935, 0.0
          %v1076 = vsel %vm852, %v940, 0.0
          %v1077 = vsel %vm853, %v940, 0.0
          %v1078 = vsel %vm854, %v945, 0.0
          %v1079 = vsel %vm855, %v945, 0.0
          %v1080 = vsel %vm856, %v950, 0.0
          %v1081 = vsel %vm857, %v950, 0.0
          %v1082 = vsel %vm858, %v955, 0.0
          %v1083 = vsel %vm859, %v955, 0.0
          %v1084 = vsel %vm860, %v960, 0.0
          %v1085 = vsel %vm861, %v960, 0.0
          %v1086 = vsel %vm862, %v965, 0.0
          %v1087 = vsel %vm863, %v965, 0.0
          %v1088 = vsel %vm864, %v970, 0.0
          %v1089 = vsel %vm865, %v970, 0.0
          %v1090 = vsel %vm866, %v975, 0.0
          %v1091 = vsel %vm867, %v975, 0.0
          %v1092 = vsel %vm868, %v980, 0.0
          %v1093 = vsel %vm869, %v980, 0.0
          %v1094 = vsel %vm870, %v985, 0.0
          %v1095 = vsel %vm871, %v985, 0.0
          %v1096 = vsel %vm872, %v990, 0.0
          %v1097 = vsel %vm873, %v990, 0.0
          %v1098 = vsel %vm874, %v995, 0.0
          %v1099 = vsel %vm875, %v995, 0.0
          %v1100 = vsel %vm876, %v1000, 0.0
          %v1101 = vsel %vm877, %v1000, 0.0
          %v1102 = vsel %vm878, %v1005, 0.0
          %v1103 = vsel %vm879, %v1005, 0.0
          %v1104 = vsel %vm880, %v1010, 0.0
          %v1105 = vsel %vm881, %v1010, 0.0
          %v1106 = vsel %vm882, %v1015, 0.0
          %v1107 = vsel %vm883, %v1015, 0.0
          %v1108 = vsel %vm884, %v1020, 0.0
          %v1109 = vsel %vm885, %v1020, 0.0
          %v1110 = vsel %vm886, %v1025, 0.0
          %v1111 = vsel %vm887, %v1025, 0.0
          %v1112 = vsel %vm888, %v1030, 0.0
          %v1113 = vsel %vm889, %v1030, 0.0
          %v1114 = vsel %vm890, %v1035, 0.0
          %v1115 = vsel %vm891, %v1035, 0.0
          %v1116 = vsel %vm892, %v1040, 0.0
          %v1117 = vsel %vm893, %v1040, 0.0
          %v1118 = vsel %vm894, %v1045, 0.0
          %v1119 = vsel %vm895, %v1045, 0.0
          %v1120 = vsel %vm896, %v1050, 0.0
          %v1121 = vsel %vm897, %v1050, 0.0
          %v1122 = vsel %vm898, %v1055, 0.0
          %v1123 = vsel %vm899, %v1055, 0.0
          %v1124 = vsel %vm900, %v1060, 0.0
          %v1125 = vsel %vm901, %v1060, 0.0
          %v1126 = vadd.f32 %v1062, %v1064
          %v1127 = vadd.f32 %v1126, %v1066
          %v1128 = vadd.f32 %v1127, %v1068
          %v1129 = vadd.f32 %v1128, %v1070
          %v1130 = vadd.f32 %v1129, %v1072
          %v1131 = vadd.f32 %v1130, %v1074
          %v1132 = vadd.f32 %v1131, %v1076
          %v1133 = vadd.f32 %v1132, %v1078
          %v1134 = vadd.f32 %v1133, %v1080
          %v1135 = vadd.f32 %v1134, %v1082
          %v1136 = vadd.f32 %v1135, %v1084
          %v1137 = vadd.f32 %v1136, %v1086
          %v1138 = vadd.f32 %v1137, %v1088
          %v1139 = vadd.f32 %v1138, %v1090
          %v1140 = vadd.f32 %v1139, %v1092
          %v1141 = vadd.f32 %v1140, %v1094
          %v1142 = vadd.f32 %v1141, %v1096
          %v1143 = vadd.f32 %v1142, %v1098
          %v1144 = vadd.f32 %v1143, %v1100
          %v1145 = vadd.f32 %v1144, %v1102
          %v1146 = vadd.f32 %v1145, %v1104
          %v1147 = vadd.f32 %v1146, %v1106
          %v1148 = vadd.f32 %v1147, %v1108
          %v1149 = vadd.f32 %v1148, %v1110
          %v1150 = vadd.f32 %v1149, %v1112
          %v1151 = vadd.f32 %v1150, %v1114
          %v1152 = vadd.f32 %v1151, %v1116
          %v1153 = vadd.f32 %v1152, %v1118
          %v1154 = vadd.f32 %v1153, %v1120
          %v1155 = vadd.f32 %v1154, %v1122
          %v1156 = vadd.f32 %v1155, %v1124
          %v1157 = vrot.slane %v1156, 4
          %v1158 = vadd.f32 %v1156, %v1157
          %v1159 = vrot.slane %v1158, 2
          %v1160 = vadd.f32 %v1158, %v1159
          %v1161 = vrot.slane %v1160, 1
          %v1162 = vadd.f32 %v1160, %v1161
          %v1163 = vadd.f32 %v1063, %v1065
          %v1164 = vadd.f32 %v1163, %v1067
          %v1165 = vadd.f32 %v1164, %v1069
          %v1166 = vadd.f32 %v1165, %v1071
          %v1167 = vadd.f32 %v1166, %v1073
          %v1168 = vadd.f32 %v1167, %v1075
          %v1169 = vadd.f32 %v1168, %v1077
          %v1170 = vadd.f32 %v1169, %v1079
          %v1171 = vadd.f32 %v1170, %v1081
          %v1172 = vadd.f32 %v1171, %v1083
          %v1173 = vadd.f32 %v1172, %v1085
          %v1174 = vadd.f32 %v1173, %v1087
          %v1175 = vadd.f32 %v1174, %v1089
          %v1176 = vadd.f32 %v1175, %v1091
          %v1177 = vadd.f32 %v1176, %v1093
          %v1178 = vadd.f32 %v1177, %v1095
          %v1179 = vadd.f32 %v1178, %v1097
          %v1180 = vadd.f32 %v1179, %v1099
          %v1181 = vadd.f32 %v1180, %v1101
          %v1182 = vadd.f32 %v1181, %v1103
          %v1183 = vadd.f32 %v1182, %v1105
          %v1184 = vadd.f32 %v1183, %v1107
          %v1185 = vadd.f32 %v1184, %v1109
          %v1186 = vadd.f32 %v1185, %v1111
          %v1187 = vadd.f32 %v1186, %v1113
          %v1188 = vadd.f32 %v1187, %v1115
          %v1189 = vadd.f32 %v1188, %v1117
          %v1190 = vadd.f32 %v1189, %v1119
          %v1191 = vadd.f32 %v1190, %v1121
          %v1192 = vadd.f32 %v1191, %v1123
          %v1193 = vadd.f32 %v1192, %v1125
          %v1194 = vrot.slane %v1193, 4
          %v1195 = vadd.f32 %v1193, %v1194
          %v1196 = vrot.slane %v1195, 2
          %v1197 = vadd.f32 %v1195, %v1196
          %v1198 = vrot.slane %v1197, 1
          %v1199 = vadd.f32 %v1197, %v1198
          %v1200 = vmul.f32 %v801, %v376
          %v1201 = vmul.f32 %v802, %v377
          %v1202 = vmul.f32 %v803, %v378
          %v1203 = vmul.f32 %v804, %v379
          %v1204 = vmul.f32 %v805, %v380
          %v1205 = vmul.f32 %v806, %v381
          %v1206 = vmul.f32 %v807, %v382
          %v1207 = vmul.f32 %v808, %v383
          %v1208 = vmul.f32 %v809, %v384
          %v1209 = vmul.f32 %v810, %v385
          %v1210 = vmul.f32 %v811, %v386
          %v1211 = vmul.f32 %v812, %v387
          %v1212 = vmul.f32 %v813, %v388
          %v1213 = vmul.f32 %v814, %v389
          %v1214 = vmul.f32 %v815, %v390
          %v1215 = vmul.f32 %v816, %v391
          %v1216 = vmul.f32 %v817, %v392
          %v1217 = vmul.f32 %v818, %v393
          %v1218 = vmul.f32 %v819, %v394
          %v1219 = vmul.f32 %v820, %v395
          %v1220 = vmul.f32 %v821, %v396
          %v1221 = vmul.f32 %v822, %v397
          %v1222 = vmul.f32 %v823, %v398
          %v1223 = vmul.f32 %v824, %v399
          %v1224 = vmul.f32 %v825, %v400
          %v1225 = vmul.f32 %v826, %v401
          %v1226 = vmul.f32 %v827, %v402
          %v1227 = vmul.f32 %v828, %v403
          %v1228 = vmul.f32 %v829, %v404
          %v1229 = vmul.f32 %v830, %v405
          %v1230 = vmul.f32 %v831, %v406
          %v1231 = vmul.f32 %v832, %v407
          %1233 = vset.pattern.permute.xlu0 0
          %1234 = vperm.xlu0 %1233, %v1200
          %v1235 = vpop.permute.xlu0 %1234
          %1238 = vset.pattern.permute.xlu0 0
          %1239 = vperm.xlu0 %1238, %v1201
          %v1240 = vpop.permute.xlu0 %1239
          %1243 = vset.pattern.permute.xlu0 0
          %1244 = vperm.xlu0 %1243, %v1202
          %v1245 = vpop.permute.xlu0 %1244
          %1248 = vset.pattern.permute.xlu0 0
          %1249 = vperm.xlu0 %1248, %v1203
          %v1250 = vpop.permute.xlu0 %1249
          %1253 = vset.pattern.permute.xlu0 0
          %1254 = vperm.xlu0 %1253, %v1204
          %v1255 = vpop.permute.xlu0 %1254
          %1258 = vset.pattern.permute.xlu0 0
          %1259 = vperm.xlu0 %1258, %v1205
          %v1260 = vpop.permute.xlu0 %1259
          %1263 = vset.pattern.permute.xlu0 0
          %1264 = vperm.xlu0 %1263, %v1206
          %v1265 = vpop.permute.xlu0 %1264
          %1268 = vset.pattern.permute.xlu0 0
          %1269 = vperm.xlu0 %1268, %v1207
          %v1270 = vpop.permute.xlu0 %1269
          %1273 = vset.pattern.permute.xlu0 0
          %1274 = vperm.xlu0 %1273, %v1208
          %v1275 = vpop.permute.xlu0 %1274
          %1278 = vset.pattern.permute.xlu0 0
          %1279 = vperm.xlu0 %1278, %v1209
          %v1280 = vpop.permute.xlu0 %1279
          %1283 = vset.pattern.permute.xlu0 0
          %1284 = vperm.xlu0 %1283, %v1210
          %v1285 = vpop.permute.xlu0 %1284
          %1288 = vset.pattern.permute.xlu0 0
          %1289 = vperm.xlu0 %1288, %v1211
          %v1290 = vpop.permute.xlu0 %1289
          %1293 = vset.pattern.permute.xlu0 0
          %1294 = vperm.xlu0 %1293, %v1212
          %v1295 = vpop.permute.xlu0 %1294
          %1298 = vset.pattern.permute.xlu0 0
          %1299 = vperm.xlu0 %1298, %v1213
          %v1300 = vpop.permute.xlu0 %1299
          %1303 = vset.pattern.permute.xlu0 0
          %1304 = vperm.xlu0 %1303, %v1214
          %v1305 = vpop.permute.xlu0 %1304
          %1308 = vset.pattern.permute.xlu0 0
          %1309 = vperm.xlu0 %1308, %v1215
          %v1310 = vpop.permute.xlu0 %1309
          %1313 = vset.pattern.permute.xlu0 0
          %1314 = vperm.xlu0 %1313, %v1216
          %v1315 = vpop.permute.xlu0 %1314
          %1318 = vset.pattern.permute.xlu0 0
          %1319 = vperm.xlu0 %1318, %v1217
          %v1320 = vpop.permute.xlu0 %1319
          %1323 = vset.pattern.permute.xlu0 0
          %1324 = vperm.xlu0 %1323, %v1218
          %v1325 = vpop.permute.xlu0 %1324
          %1328 = vset.pattern.permute.xlu0 0
          %1329 = vperm.xlu0 %1328, %v1219
          %v1330 = vpop.permute.xlu0 %1329
          %1333 = vset.pattern.permute.xlu0 0
          %1334 = vperm.xlu0 %1333, %v1220
          %v1335 = vpop.permute.xlu0 %1334
          %1338 = vset.pattern.permute.xlu0 0
          %1339 = vperm.xlu0 %1338, %v1221
          %v1340 = vpop.permute.xlu0 %1339
          %1343 = vset.pattern.permute.xlu0 0
          %1344 = vperm.xlu0 %1343, %v1222
          %v1345 = vpop.permute.xlu0 %1344
          %1348 = vset.pattern.permute.xlu0 0
          %1349 = vperm.xlu0 %1348, %v1223
          %v1350 = vpop.permute.xlu0 %1349
          %1353 = vset.pattern.permute.xlu0 0
          %1354 = vperm.xlu0 %1353, %v1224
          %v1355 = vpop.permute.xlu0 %1354
          %1358 = vset.pattern.permute.xlu0 0
          %1359 = vperm.xlu0 %1358, %v1225
          %v1360 = vpop.permute.xlu0 %1359
          %1363 = vset.pattern.permute.xlu0 0
          %1364 = vperm.xlu0 %1363, %v1226
          %v1365 = vpop.permute.xlu0 %1364
          %1368 = vset.pattern.permute.xlu0 0
          %1369 = vperm.xlu0 %1368, %v1227
          %v1370 = vpop.permute.xlu0 %1369
          %1373 = vset.pattern.permute.xlu0 0
          %1374 = vperm.xlu0 %1373, %v1228
          %v1375 = vpop.permute.xlu0 %1374
          %1378 = vset.pattern.permute.xlu0 0
          %1379 = vperm.xlu0 %1378, %v1229
          %v1380 = vpop.permute.xlu0 %1379
          %1383 = vset.pattern.permute.xlu0 0
          %1384 = vperm.xlu0 %1383, %v1230
          %v1385 = vpop.permute.xlu0 %1384
          %1388 = vset.pattern.permute.xlu0 0
          %1389 = vperm.xlu0 %1388, %v1231
          %v1390 = vpop.permute.xlu0 %1389
          %v1392 = vsel %vm838, %v1235, 0.0
          %v1393 = vsel %vm839, %v1235, 0.0
          %v1394 = vsel %vm840, %v1240, 0.0
          %v1395 = vsel %vm841, %v1240, 0.0
          %v1396 = vsel %vm842, %v1245, 0.0
          %v1397 = vsel %vm843, %v1245, 0.0
          %v1398 = vsel %vm844, %v1250, 0.0
          %v1399 = vsel %vm845, %v1250, 0.0
          %v1400 = vsel %vm846, %v1255, 0.0
          %v1401 = vsel %vm847, %v1255, 0.0
          %v1402 = vsel %vm848, %v1260, 0.0
          %v1403 = vsel %vm849, %v1260, 0.0
          %v1404 = vsel %vm850, %v1265, 0.0
          %v1405 = vsel %vm851, %v1265, 0.0
          %v1406 = vsel %vm852, %v1270, 0.0
          %v1407 = vsel %vm853, %v1270, 0.0
          %v1408 = vsel %vm854, %v1275, 0.0
          %v1409 = vsel %vm855, %v1275, 0.0
          %v1410 = vsel %vm856, %v1280, 0.0
          %v1411 = vsel %vm857, %v1280, 0.0
          %v1412 = vsel %vm858, %v1285, 0.0
          %v1413 = vsel %vm859, %v1285, 0.0
          %v1414 = vsel %vm860, %v1290, 0.0
          %v1415 = vsel %vm861, %v1290, 0.0
          %v1416 = vsel %vm862, %v1295, 0.0
          %v1417 = vsel %vm863, %v1295, 0.0
          %v1418 = vsel %vm864, %v1300, 0.0
          %v1419 = vsel %vm865, %v1300, 0.0
          %v1420 = vsel %vm866, %v1305, 0.0
          %v1421 = vsel %vm867, %v1305, 0.0
          %v1422 = vsel %vm868, %v1310, 0.0
          %v1423 = vsel %vm869, %v1310, 0.0
          %v1424 = vsel %vm870, %v1315, 0.0
          %v1425 = vsel %vm871, %v1315, 0.0
          %v1426 = vsel %vm872, %v1320, 0.0
          %v1427 = vsel %vm873, %v1320, 0.0
          %v1428 = vsel %vm874, %v1325, 0.0
          %v1429 = vsel %vm875, %v1325, 0.0
          %v1430 = vsel %vm876, %v1330, 0.0
          %v1431 = vsel %vm877, %v1330, 0.0
          %v1432 = vsel %vm878, %v1335, 0.0
          %v1433 = vsel %vm879, %v1335, 0.0
          %v1434 = vsel %vm880, %v1340, 0.0
          %v1435 = vsel %vm881, %v1340, 0.0
          %v1436 = vsel %vm882, %v1345, 0.0
          %v1437 = vsel %vm883, %v1345, 0.0
          %v1438 = vsel %vm884, %v1350, 0.0
          %v1439 = vsel %vm885, %v1350, 0.0
          %v1440 = vsel %vm886, %v1355, 0.0
          %v1441 = vsel %vm887, %v1355, 0.0
          %v1442 = vsel %vm888, %v1360, 0.0
          %v1443 = vsel %vm889, %v1360, 0.0
          %v1444 = vsel %vm890, %v1365, 0.0
          %v1445 = vsel %vm891, %v1365, 0.0
          %v1446 = vsel %vm892, %v1370, 0.0
          %v1447 = vsel %vm893, %v1370, 0.0
          %v1448 = vsel %vm894, %v1375, 0.0
          %v1449 = vsel %vm895, %v1375, 0.0
          %v1450 = vsel %vm896, %v1380, 0.0
          %v1451 = vsel %vm897, %v1380, 0.0
          %v1452 = vsel %vm898, %v1385, 0.0
          %v1453 = vsel %vm899, %v1385, 0.0
          %v1454 = vsel %vm900, %v1390, 0.0
          %v1455 = vsel %vm901, %v1390, 0.0
          %v1456 = vadd.f32 %v1392, %v1394
          %v1457 = vadd.f32 %v1456, %v1396
          %v1458 = vadd.f32 %v1457, %v1398
          %v1459 = vadd.f32 %v1458, %v1400
          %v1460 = vadd.f32 %v1459, %v1402
          %v1461 = vadd.f32 %v1460, %v1404
          %v1462 = vadd.f32 %v1461, %v1406
          %v1463 = vadd.f32 %v1462, %v1408
          %v1464 = vadd.f32 %v1463, %v1410
          %v1465 = vadd.f32 %v1464, %v1412
          %v1466 = vadd.f32 %v1465, %v1414
          %v1467 = vadd.f32 %v1466, %v1416
          %v1468 = vadd.f32 %v1467, %v1418
          %v1469 = vadd.f32 %v1468, %v1420
          %v1470 = vadd.f32 %v1469, %v1422
          %v1471 = vadd.f32 %v1470, %v1424
          %v1472 = vadd.f32 %v1471, %v1426
          %v1473 = vadd.f32 %v1472, %v1428
          %v1474 = vadd.f32 %v1473, %v1430
          %v1475 = vadd.f32 %v1474, %v1432
          %v1476 = vadd.f32 %v1475, %v1434
          %v1477 = vadd.f32 %v1476, %v1436
          %v1478 = vadd.f32 %v1477, %v1438
          %v1479 = vadd.f32 %v1478, %v1440
          %v1480 = vadd.f32 %v1479, %v1442
          %v1481 = vadd.f32 %v1480, %v1444
          %v1482 = vadd.f32 %v1481, %v1446
          %v1483 = vadd.f32 %v1482, %v1448
          %v1484 = vadd.f32 %v1483, %v1450
          %v1485 = vadd.f32 %v1484, %v1452
          %v1486 = vadd.f32 %v1485, %v1454
          %v1487 = vrot.slane %v1486, 4
          %v1488 = vadd.f32 %v1486, %v1487
          %v1489 = vrot.slane %v1488, 2
          %v1490 = vadd.f32 %v1488, %v1489
          %v1491 = vrot.slane %v1490, 1
          %v1492 = vadd.f32 %v1490, %v1491
          %v1493 = vadd.f32 %v1393, %v1395
          %v1494 = vadd.f32 %v1493, %v1397
          %v1495 = vadd.f32 %v1494, %v1399
          %v1496 = vadd.f32 %v1495, %v1401
          %v1497 = vadd.f32 %v1496, %v1403
          %v1498 = vadd.f32 %v1497, %v1405
          %v1499 = vadd.f32 %v1498, %v1407
          %v1500 = vadd.f32 %v1499, %v1409
          %v1501 = vadd.f32 %v1500, %v1411
          %v1502 = vadd.f32 %v1501, %v1413
          %v1503 = vadd.f32 %v1502, %v1415
          %v1504 = vadd.f32 %v1503, %v1417
          %v1505 = vadd.f32 %v1504, %v1419
          %v1506 = vadd.f32 %v1505, %v1421
          %v1507 = vadd.f32 %v1506, %v1423
          %v1508 = vadd.f32 %v1507, %v1425
          %v1509 = vadd.f32 %v1508, %v1427
          %v1510 = vadd.f32 %v1509, %v1429
          %v1511 = vadd.f32 %v1510, %v1431
          %v1512 = vadd.f32 %v1511, %v1433
          %v1513 = vadd.f32 %v1512, %v1435
          %v1514 = vadd.f32 %v1513, %v1437
          %v1515 = vadd.f32 %v1514, %v1439
          %v1516 = vadd.f32 %v1515, %v1441
          %v1517 = vadd.f32 %v1516, %v1443
          %v1518 = vadd.f32 %v1517, %v1445
          %v1519 = vadd.f32 %v1518, %v1447
          %v1520 = vadd.f32 %v1519, %v1449
          %v1521 = vadd.f32 %v1520, %v1451
          %v1522 = vadd.f32 %v1521, %v1453
          %v1523 = vadd.f32 %v1522, %v1455
          %v1524 = vrot.slane %v1523, 4
          %v1525 = vadd.f32 %v1523, %v1524
          %v1526 = vrot.slane %v1525, 2
          %v1527 = vadd.f32 %v1525, %v1526
          %v1528 = vrot.slane %v1527, 1
          %v1529 = vadd.f32 %v1527, %v1528
          %v1530 = vsub.f32 256.0, %v1162
          %v1531 = vsub.f32 256.0, %v1199
          %v1532 = vmax.f32 %v1162, 1.0
          %v1533 = vmax.f32 %v1199, 1.0
          %v1534 = vrcp.pop %v1532
          %v1535 = vmul.f32 %v1532, %v1534
          %v1536 = vsub.f32 1.0, %v1535
          %v1537 = vmul.f32 %v1534, %v1536
          %v1538 = vadd.f32 %v1534, %v1537
          %vm1539 = vweird.f32 %v1532
          %vm1540 = vweird.f32 %v1534
          %vm1541 = vmor %vm1539, %vm1540
          %v1542 = vsel %vm1541, %v1534, %v1538
          %v1543 = vand.u32 2147483647, %v1532
          %vm1544 = vcmp.eq.f32.partialorder %v1543, 8.507059e+37
          %v1545 = vand.u32 %v1532, 2147483648
          %v1546 = vor.u32 1.1754944e-38, %v1545
          %v1547 = vsel %vm1544, %v1546, %v1542
          %v1548 = vmul.f32 %v1492, %v1547
          %v1549 = vrcp.pop %v1533
          %v1550 = vmul.f32 %v1533, %v1549
          %v1551 = vsub.f32 1.0, %v1550
          %v1552 = vmul.f32 %v1549, %v1551
          %v1553 = vadd.f32 %v1549, %v1552
          %vm1554 = vweird.f32 %v1533
          %vm1555 = vweird.f32 %v1549
          %vm1556 = vmor %vm1554, %vm1555
          %v1557 = vsel %vm1556, %v1549, %v1553
          %v1558 = vand.u32 2147483647, %v1533
          %vm1559 = vcmp.eq.f32.partialorder %v1558, 8.507059e+37
          %v1560 = vand.u32 %v1533, 2147483648
          %v1561 = vor.u32 1.1754944e-38, %v1560
          %v1562 = vsel %vm1559, %v1561, %v1557
          %v1563 = vmul.f32 %v1529, %v1562
          %1565 = vset.pattern.permute.xlu0 127
          %1566 = vperm.xlu0 %1565, %v1529
          %v1567 = vpop.permute.xlu0 %1566
          %v1569 = vsub.f32 %v1567, %v1492
          %v1570 = vsub.f32 %v1567, %v1529
          %v1571 = vmax.f32 %v1530, 1.0
          %v1572 = vmax.f32 %v1531, 1.0
          %v1573 = vrcp.pop %v1571
          %v1574 = vmul.f32 %v1571, %v1573
          %v1575 = vsub.f32 1.0, %v1574
          %v1576 = vmul.f32 %v1573, %v1575
          %v1577 = vadd.f32 %v1573, %v1576
          %vm1578 = vweird.f32 %v1571
          %vm1579 = vweird.f32 %v1573
          %vm1580 = vmor %vm1578, %vm1579
          %v1581 = vsel %vm1580, %v1573, %v1577
          %v1582 = vand.u32 2147483647, %v1571
          %vm1583 = vcmp.eq.f32.partialorder %v1582, 8.507059e+37
          %v1584 = vand.u32 %v1571, 2147483648
          %v1585 = vor.u32 1.1754944e-38, %v1584
          %v1586 = vsel %vm1583, %v1585, %v1581
          %v1587 = vmul.f32 %v1569, %v1586
          %v1588 = vrcp.pop %v1572
          %v1589 = vmul.f32 %v1572, %v1588
          %v1590 = vsub.f32 1.0, %v1589
          %v1591 = vmul.f32 %v1588, %v1590
          %v1592 = vadd.f32 %v1588, %v1591
          %vm1593 = vweird.f32 %v1572
          %vm1594 = vweird.f32 %v1588
          %vm1595 = vmor %vm1593, %vm1594
          %v1596 = vsel %vm1595, %v1588, %v1592
          %v1597 = vand.u32 2147483647, %v1572
          %vm1598 = vcmp.eq.f32.partialorder %v1597, 8.507059e+37
          %v1599 = vand.u32 %v1572, 2147483648
          %v1600 = vor.u32 1.1754944e-38, %v1599
          %v1601 = vsel %vm1598, %v1600, %v1596
          %v1602 = vmul.f32 %v1570, %v1601
          %v1603 = vmul.f32 %v1162, %v1530
          %v1604 = vmul.f32 %v1199, %v1531
          %v1605 = vsub.f32 %v1548, %v1587
          %v1606 = vsub.f32 %v1563, %v1602
          %v1607 = vmul.f32 %v1605, %v1605
          %v1608 = vmul.f32 %v1606, %v1606
          %v1609 = vmul.f32 %v1603, %v1607
          %v1610 = vmul.f32 %v1604, %v1608
          %v1611 = vcvt.f32.s32.to.zero.pseudo %v297
          %v1612 = vsub.s32 %v1611, 1
          %1613 = vset.pattern.permute.xlu0 1
          %1614 = vperm.xlu0 %1613, %v1612
          %v1615 = vpop.permute.xlu0 %1614
          %v1616 = vperm.slane %v1615, 0
          %vm1617 = vcmp.lt.s32.totalorder %v834, %v1616
          %vm1618 = vcmp.lt.s32.totalorder %v835, %v1616
          %v1619 = vsel %vm1617, %v1609, -3e+38
          %v1620 = vsel %vm1618, %v1610, -3e+38
          %v1621 = vmax.f32 %v1619, %v1620
          %1622 = vmax.xlane.f32.xlu0 %v1621
          %v1623 = vpop.xlane.xlu0 %1622
          %s1624 = vtos %v1623
          %v1625 = vstv %s1624
          %vm1626 = vcmp.eq.f32.partialorder %v1619, %v1625
          %vm1627 = vcmp.eq.f32.partialorder %v1620, %v1625
          %v1628 = vsel %vm1626, %v834, 256
          %v1629 = vsel %vm1627, %v835, 256
          %vm1630 = vcmp.lt.s32.totalorder %v1628, %v1629
          %v1631 = vsel %vm1630, %v1628, %v1629
          %v1632 = vand.u32 %v1631, 65535
          %v1633 = vshra.s32 %v1631, 16
          %v1634 = vcvt.s32.f32 %v1632
          %v1635 = vcvt.s32.f32 %v1633
          %1636 = vmin.xlane.f32.xlu0 %v1635
          %v1637 = vpop.xlane.xlu0 %1636
          %vm1638 = vcmp.eq.f32.partialorder %v1635, %v1637
          %v1639 = vsel %vm1638, %v1634, inf
          %1640 = vmin.xlane.f32.xlu0 %v1639
          %v1641 = vpop.xlane.xlu0 %1640
          %v1642 = vcvt.f32.s32 %v1641
          %v1643 = vcvt.f32.s32 %v1637
          %v1644 = vshll.u32 %v1643, 16
          %v1645 = vadd.s32 %v1644, %v1642
          %s1646 = vtos %v1645
          %s1647 = scvt.s32.f32 %s1646
          %v1648 = vstv %s1647
          %v1649 = vadd.f32 %v286, %v1648
          %1651 = vrot.lane.b32.xlu0 %v1649, 1
          %v1652 = vpop.permute.xlu0 %1651
          %v1654 = vsel %vm292, %v289, %v1652
          %1656 = vset.pattern.permute.xlu0 1
          %1657 = vperm.xlu0 %1656, %v1654
          %v1658 = vpop.permute.xlu0 %1657
          %v1660 = vperm.slane %v1658, 0
          %1661 = vst [vmem:[%s241] sm:$0x1] %v1660
          %v1662 = vsel %vm292, 1, 0
          %1663 = vset.pattern.permute.xlu0 1
          %1664 = vperm.xlu0 %1663, %v1662
          %v1665 = vpop.permute.xlu0 %1664
          %v1666 = vperm.slane %v1665, 0
          %1667 = vst [vmem:[%s247] sm:$0x1] %v1666
        $region44: #{tpu_custom_call.1} parent=27 // pred_fallthru
          _
        %s1668 = sand.u32 %s101, 1
        %s1669 = scalar_lea.sflag [#allocation5], %s1668
        %s1670 = sand.u32 %s101, 1
        %s1671 = scalar_lea.vmem [#allocation8], %s1670
        %s1672 = sand.u32 %s127, 1
        %s1673 = scalar_lea.sflag [#allocation10], %s1672
        %s1674 = sand.u32 %s127, 1
        %s1675 = scalar_lea.vmem [#allocation9], %s1674
        // Predicated region
        $region45: #{tpu_custom_call.1} parent=27 // pred_check
          %p1676 = pneg %p111
        $region46: #{tpu_custom_call.1} parent=27 // pred_check_branch
          %1678 = sbr.rel (%p1676) target = $region48
        $region47: #{tpu_custom_call.1} parent=27 // pred_region
          %1680 = vsyncadd %s1669, 0
          %s1681 = scalar_lea.hbm %s2, %s31
          %s1683 = sshll.u32 %s1671, 4
          %s1684 = int_to_ptr.vmem [resolvable:$true] %s1683
          %s1685 = sshll.u32 %s1681, 4
          %s1686 = int_to_ptr.hbm [resolvable:$true] %s1685
          %1688 = dma.vmem_to_hbm [thread:$0]  %s1684, 16, %s1686, %s1669
        $region48: #{tpu_custom_call.1} parent=27 // pred_fallthru
          _
        // Predicated region
        $region49: #{tpu_custom_call.1} parent=27 // pred_check
          %p1689 = pneg %p137
        $region50: #{tpu_custom_call.1} parent=27 // pred_check_branch
          %1691 = sbr.rel (%p1689) target = $region52
        $region51: #{tpu_custom_call.1} parent=27 // pred_region
          %1693 = vsyncadd %s1673, 0
          %s1694 = scalar_lea.hbm %s3, %s31
          %s1696 = sshll.u32 %s1675, 4
          %s1697 = int_to_ptr.vmem [resolvable:$true] %s1696
          %s1698 = sshll.u32 %s1694, 4
          %s1699 = int_to_ptr.hbm [resolvable:$true] %s1698
          %1701 = dma.vmem_to_hbm [thread:$0]  %s1697, 16, %s1699, %s1673
        $region52: #{tpu_custom_call.1} parent=27 // pred_fallthru
          _
      $region28: #{tpu_custom_call.1} parent=5 // pred_fallthru
        _
      %p1702 = scmp.le.s32.totalorder 2, %s22
      // Predicated region
      $region53: #{tpu_custom_call.1} parent=5 // pred_check
        %p1703 = pneg %p1702
      $region54: #{tpu_custom_call.1} parent=5 // pred_check_branch
        %1705 = sbr.rel (%p1703) target = $region56
      $region55: #{tpu_custom_call.1} parent=5 // pred_region
        %s1706 = ssub.s32 %s22, 2
        // Predicated region
        $region57: #{tpu_custom_call.1} parent=55 // pred_check
          %p1707 = pneg %p117
        $region58: #{tpu_custom_call.1} parent=55 // pred_check_branch
          %1709 = sbr.rel (%p1707) target = $region60
        $region59: #{tpu_custom_call.1} parent=55 // pred_region
          %s1710 = sand.u32 %s102, 1
          %s1711 = scalar_lea.sflag [#allocation5], %s1710
          %s1712 = sand.u32 %s102, 1
          %s1713 = scalar_lea.vmem [#allocation8], %s1712
          %1715 = dma.done %s1711, 16
        $region60: #{tpu_custom_call.1} parent=55 // pred_fallthru
          _
        // Predicated region
        $region61: #{tpu_custom_call.1} parent=55 // pred_check
          %p1716 = pneg %p143
        $region62: #{tpu_custom_call.1} parent=55 // pred_check_branch
          %1718 = sbr.rel (%p1716) target = $region64
        $region63: #{tpu_custom_call.1} parent=55 // pred_region
          %s1719 = sand.u32 %s128, 1
          %s1720 = scalar_lea.sflag [#allocation10], %s1719
          %s1721 = sand.u32 %s128, 1
          %s1722 = scalar_lea.vmem [#allocation9], %s1721
          %1724 = dma.done %s1720, 16
        $region64: #{tpu_custom_call.1} parent=55 // pred_fallthru
          _
      $region56: #{tpu_custom_call.1} parent=5 // pred_fallthru
        _
    $region6: #{tpu_custom_call.1} parent=1 // loop_footer
      %s26 = sadd.s32 1, %s22
    $region7: #{tpu_custom_call.1} parent=1 // loop_footer_branch
      %21 = sbr.rel target = $region3
    $region8: #{tpu_custom_call.1} parent=1 // loop_exit
      _
    %1725 = vsyncpa [#allocation4], 1
    %s1726 = scalar_lea.sflag [#allocation4], 1
    %1727 = vsyncpa %s1726, 1
    %1728 = vsyncpa [#allocation7], 1
    %s1729 = scalar_lea.sflag [#allocation7], 1
    %1730 = vsyncpa %s1729, 1
    %1731 = vsyncpa [#allocation5], 1
    %s1732 = scalar_lea.sflag [#allocation5], 1
    %1733 = vsyncpa %s1732, 1
    %1734 = vsyncpa [#allocation10], 1
    %s1735 = scalar_lea.sflag [#allocation10], 1
    %1736 = vsyncpa %s1735, 1

</llo_original>
